<compile_context>
chip_gen: v7x
topology: tpu7x:2x2x1
jax: 0.10.0
libtpu: 0.0.40
codegen_flags: <defaults>
</compile_context>

<pallas_src>
import math
import functools

import numpy as np
import jax
import jax.numpy as jnp
from jax import lax
from jax.experimental import pallas as pl
from jax.experimental.pallas import tpu as pltpu

# ----- small GPT-2 style config -----
VOCAB     = 64
MAX_POS   = 32
N_EMBD    = 32
N_HEAD    = 2
HEAD_DIM  = N_EMBD // N_HEAD
N_LAYER   = 2
N_INNER   = 4 * N_EMBD
N_CLASSES = 2
OUT_PAD   = 128            # lane-dense padded logits width
LN_EPS    = 1e-5


# ---------------- in-kernel math helpers ----------------
def _layer_norm(x, w, b):
    mu  = jnp.mean(x, axis=-1, keepdims=True)
    var = jnp.mean(jnp.square(x - mu), axis=-1, keepdims=True)
    return (x - mu) * lax.rsqrt(var + LN_EPS) * w + b


def _gelu_new(x):
    # GPT-2 "gelu_new" (tanh approximation)
    return 0.5 * x * (1.0 + jnp.tanh(0.7978845608028654 * (x + 0.044715 * x * x * x)))


# ---------------- the fused kernel: embeddings + full GPT-2 stack + head ----------------
def gpt2_cls_kernel(S,
                    ids_ref, bias_ref, pos_oh_ref,
                    wte_ref, wpe_ref,
                    lnp_ref,            # (L, 6, D): ln1_w, ln1_b, ln2_w, ln2_b, b_aproj, b_mproj
                    w_attn_ref, b_attn_ref,
                    w_aproj_ref,        # (L, H, HEAD_DIM, D)
                    w_fc_ref, b_fc_ref,
                    w_mproj_ref,
                    lnf_ref,            # (2, D): lnf_w, lnf_b
                    head_w_ref, head_b_ref,   # (D, OUT_PAD), (1, OUT_PAD)  zero-padded past 2
                    out_ref):           # (B*S, OUT_PAD)
    BS = ids_ref.shape[0]

    # ---- fused embedding: token one-hot @ wte  +  position one-hot @ wpe[:S] ----
    ids = ids_ref[...]                                             # (BS, 1) int32
    tok_iota = lax.broadcasted_iota(jnp.int32, (BS, VOCAB), 1)
    tok_oh = (ids == tok_iota).astype(jnp.float32)                 # (BS, VOCAB)
    h = jnp.dot(tok_oh, wte_ref[...], preferred_element_type=jnp.float32)
    h = h + jnp.dot(pos_oh_ref[...], wpe_ref[0:S, :],
                    preferred_element_type=jnp.float32)

    bias = bias_ref[...]                                           # (BS, BS) block-diag causal
    inv_sqrt_hd = jnp.float32(1.0 / math.sqrt(HEAD_DIM))

    for l in range(N_LAYER):                                       # static unroll over layers
        lnv = lnp_ref[l]                                           # (6, D)

        # ---------- causal self-attention ----------
        xn  = _layer_norm(h, lnv[0], lnv[1])
        qkv = jnp.dot(xn, w_attn_ref[l], preferred_element_type=jnp.float32) + b_attn_ref[l]
        wap = w_aproj_ref[l]                                       # (H, HEAD_DIM, D)

        attn = jnp.zeros((BS, N_EMBD), jnp.float32)
        for hh in range(N_HEAD):                                   # static unroll over heads
            lo = hh * HEAD_DIM
            qh = qkv[:, lo:lo + HEAD_DIM]
            kh = qkv[:, N_EMBD + lo:N_EMBD + lo + HEAD_DIM]
            vh = qkv[:, 2 * N_EMBD + lo:2 * N_EMBD + lo + HEAD_DIM]
            s = lax.dot_general(qh, kh, (((1,), (1,)), ((), ())),
                                preferred_element_type=jnp.float32)
            s = s * inv_sqrt_hd + bias
            m = jnp.max(s, axis=-1, keepdims=True)
            e = jnp.exp(s - m)
            p = e * pl.reciprocal(jnp.sum(e, axis=-1, keepdims=True), approx=True)
            oh = jnp.dot(p, vh, preferred_element_type=jnp.float32)          # (BS, HEAD_DIM)
            # accumulate head output directly through its slice of the output projection
            attn = attn + jnp.dot(oh, wap[hh], preferred_element_type=jnp.float32)
        h = h + attn + lnv[4]                                      # + b_aproj

        # ---------- MLP ----------
        xn = _layer_norm(h, lnv[2], lnv[3])
        f  = jnp.dot(xn, w_fc_ref[l], preferred_element_type=jnp.float32) + b_fc_ref[l]
        f  = _gelu_new(f)
        h  = h + jnp.dot(f, w_mproj_ref[l], preferred_element_type=jnp.float32) + lnv[5]

    # ---------- final LN + lane-dense (padded) classification head ----------
    h = _layer_norm(h, lnf_ref[0], lnf_ref[1])
    out_ref[...] = jnp.dot(h, head_w_ref[...],
                           preferred_element_type=jnp.float32) + head_b_ref[0]


# ---------------- wrapper ----------------
def _vmem():
    return pl.BlockSpec(memory_space=pltpu.MemorySpace.VMEM)


@jax.jit
def gpt2_classify(input_ids, packed):
    B, S = input_ids.shape
    BS = B * S
    ids2d = input_ids.reshape(BS, 1).astype(jnp.int32)

    # Trace-time constants (B, S are static under jit): block-diagonal causal bias
    # and the position one-hot selector. Baked into the program, no per-call XLA ops.
    r = np.arange(BS)[:, None]
    c = np.arange(BS)[None, :]
    causal = (r // S == c // S) & (c <= r)
    bias = np.where(causal, 0.0, -1e9).astype(np.float32)               # (BS, BS)
    pos_oh = (np.arange(BS)[:, None] % S ==
              np.arange(S)[None, :]).astype(np.float32)                 # (BS, S)

    args = (ids2d, jnp.asarray(bias), jnp.asarray(pos_oh),
            packed["wte"], packed["wpe"], packed["lnp"],
            packed["w_attn"], packed["b_attn"], packed["w_aproj"],
            packed["w_fc"], packed["b_fc"], packed["w_mproj"],
            packed["lnf"], packed["head_w"], packed["head_b"])

    out = pl.pallas_call(
        functools.partial(gpt2_cls_kernel, S),
        out_shape=jax.ShapeDtypeStruct((BS, OUT_PAD), jnp.float32),
        in_specs=[_vmem() for _ in args],
        out_specs=_vmem(),
    )(*args)
    return out[:, :N_CLASSES].reshape(B, S, N_CLASSES)


# ---------------- parameter init (logical, reference-shaped) & one-time packing ----------------
def init_params(key):
    ks = jax.random.split(key, 10)
    nrm = lambda k, shape: (0.02 * jax.random.normal(k, shape)).astype(jnp.float32)
    return {
        "wte":     nrm(ks[0], (VOCAB, N_EMBD)),
        "wpe":     nrm(ks[1], (MAX_POS, N_EMBD)),
        "ln1_w":   jnp.ones((N_LAYER, N_EMBD), jnp.float32),
        "ln1_b":   jnp.zeros((N_LAYER, N_EMBD), jnp.float32),
        "w_attn":  nrm(ks[2], (N_LAYER, N_EMBD, 3 * N_EMBD)),
        "b_attn":  jnp.zeros((N_LAYER, 3 * N_EMBD), jnp.float32),
        "w_aproj": nrm(ks[3], (N_LAYER, N_EMBD, N_EMBD)),
        "b_aproj": jnp.zeros((N_LAYER, N_EMBD), jnp.float32),
        "ln2_w":   jnp.ones((N_LAYER, N_EMBD), jnp.float32),
        "ln2_b":   jnp.zeros((N_LAYER, N_EMBD), jnp.float32),
        "w_fc":    nrm(ks[4], (N_LAYER, N_EMBD, N_INNER)),
        "b_fc":    jnp.zeros((N_LAYER, N_INNER), jnp.float32),
        "w_mproj": nrm(ks[5], (N_LAYER, N_INNER, N_EMBD)),
        "b_mproj": jnp.zeros((N_LAYER, N_EMBD), jnp.float32),
        "lnf_w":   jnp.ones((1, N_EMBD), jnp.float32),
        "lnf_b":   jnp.zeros((1, N_EMBD), jnp.float32),
        # nn.Linear(n_embd, 2): stored as W.T (D, 2) so logits = x @ head_w + head_b
        "head_w":  nrm(ks[6], (N_EMBD, N_CLASSES)),
        "head_b":  nrm(ks[7], (1, N_CLASSES)),
    }


def pack_params(p):
    """One-time repack into kernel layout (done outside jit, not per call)."""
    lnp = jnp.stack([p["ln1_w"], p["ln1_b"], p["ln2_w"], p["ln2_b"],
                     p["b_aproj"], p["b_mproj"]], axis=1)                  # (L, 6, D)
    lnf = jnp.stack([p["lnf_w"][0], p["lnf_b"][0]], axis=0)                # (2, D)
    head_w = jnp.zeros((N_EMBD, OUT_PAD), jnp.float32).at[:, :N_CLASSES].set(p["head_w"])
    head_b = jnp.zeros((1, OUT_PAD), jnp.float32).at[:, :N_CLASSES].set(p["head_b"])
    return {
        "wte": p["wte"], "wpe": p["wpe"], "lnp": lnp,
        "w_attn": p["w_attn"], "b_attn": p["b_attn"],
        "w_aproj": p["w_aproj"].reshape(N_LAYER, N_HEAD, HEAD_DIM, N_EMBD),
        "w_fc": p["w_fc"], "b_fc": p["b_fc"], "w_mproj": p["w_mproj"],
        "lnf": lnf, "head_w": head_w, "head_b": head_b,
    }


# ---------------- pure-JAX reference (same math, for correctness check) ----------------
def reference_forward(input_ids, p):
    B, S = input_ids.shape
    h = jnp.take(p["wte"], input_ids, axis=0) + p["wpe"][jnp.arange(S)][None]
    rows = jnp.arange(S)[:, None]
    cols = jnp.arange(S)[None, :]
    causal = cols <= rows
    for l in range(N_LAYER):
        xn = _layer_norm(h, p["ln1_w"][l], p["ln1_b"][l])
        qkv = xn @ p["w_attn"][l] + p["b_attn"][l]
        q, k, v = jnp.split(qkv, 3, axis=-1)
        q = q.reshape(B, S, N_HEAD, HEAD_DIM).transpose(0, 2, 1, 3)
        k = k.reshape(B, S, N_HEAD, HEAD_DIM).transpose(0, 2, 1, 3)
        v = v.reshape(B, S, N_HEAD, HEAD_DIM).transpose(0, 2, 1, 3)
        s = jnp.einsum("bhqd,bhkd->bhqk", q, k) / math.sqrt(HEAD_DIM)
        s = jnp.where(causal, s, -1e9)
        a = jax.nn.softmax(s, axis=-1)
        o = jnp.einsum("bhqk,bhkd->bhqd", a, v).transpose(0, 2, 1, 3).reshape(B, S, N_EMBD)
        h = h + (o @ p["w_aproj"][l] + p["b_aproj"][l])
        xn = _layer_norm(h, p["ln2_w"][l], p["ln2_b"][l])
        f = _gelu_new(xn @ p["w_fc"][l] + p["b_fc"][l])
        h = h + (f @ p["w_mproj"][l] + p["b_mproj"][l])
    h = _layer_norm(h, p["lnf_w"][0], p["lnf_b"][0])
    return h @ p["head_w"] + p["head_b"][0]


if __name__ == "__main__":
    key = jax.random.PRNGKey(0)
    k_param, k_ids = jax.random.split(key)
    params = init_params(k_param)
    packed = pack_params(params)

    B, S = 2, 8
    input_ids = jax.random.randint(k_ids, (B, S), 0, VOCAB, dtype=jnp.int32)

    logits = jax.block_until_ready(gpt2_classify(input_ids, packed))
    ref = reference_forward(input_ids, params)

    assert logits.shape == (B, S, N_CLASSES)
    # tolerance accounts for the approximate EUP reciprocal in the softmax denominator
    assert jnp.allclose(logits, ref, rtol=5e-3, atol=5e-3), (
        "mismatch vs pure-JAX reference: max|diff|=%g"
        % float(jnp.max(jnp.abs(logits - ref))))
    print("KERNEL_OK")
</pallas_src>

<mosaic_0001>
module attributes {stable_mosaic.version = 11 : i64} {
  func.func @gpt2_cls_kernel(%arg0: memref<16x1xi32, #tpu.memory_space<vmem>>, %arg1: memref<16x16xf32, #tpu.memory_space<vmem>>, %arg2: memref<16x8xf32, #tpu.memory_space<vmem>>, %arg3: memref<64x32xf32, #tpu.memory_space<vmem>>, %arg4: memref<32x32xf32, #tpu.memory_space<vmem>>, %arg5: memref<2x6x32xf32, #tpu.memory_space<vmem>>, %arg6: memref<2x32x96xf32, #tpu.memory_space<vmem>>, %arg7: memref<2x96xf32, #tpu.memory_space<vmem>>, %arg8: memref<2x2x16x32xf32, #tpu.memory_space<vmem>>, %arg9: memref<2x32x128xf32, #tpu.memory_space<vmem>>, %arg10: memref<2x128xf32, #tpu.memory_space<vmem>>, %arg11: memref<2x128x32xf32, #tpu.memory_space<vmem>>, %arg12: memref<2x32xf32, #tpu.memory_space<vmem>>, %arg13: memref<32x128xf32, #tpu.memory_space<vmem>>, %arg14: memref<1x128xf32, #tpu.memory_space<vmem>>, %arg15: memref<16x128xf32, #tpu.memory_space<vmem>>) attributes {dimension_semantics = [], scalar_prefetch = 0 : i64, scratch_operands = 0 : i64, tpu.core_type = #tpu.core_type<tc>} {
    %c0 = arith.constant 0 : index
    %c0_0 = arith.constant 0 : index
    %0 = vector.load %arg0[%c0, %c0_0] : memref<16x1xi32, #tpu.memory_space<vmem>>, vector<16x1xi32>
    %1 = tpu.iota {dimensions = array<i32: 1>} : vector<16x64xi32>
    %2 = vector.broadcast %0 : vector<16x1xi32> to vector<16x64xi32>
    %3 = arith.cmpi eq, %2, %1 : vector<16x64xi32>
    %4 = arith.extui %3 : vector<16x64xi1> to vector<16x64xi32>
    %5 = arith.sitofp %4 : vector<16x64xi32> to vector<16x64xf32>
    %c0_1 = arith.constant 0 : index
    %c0_2 = arith.constant 0 : index
    %6 = vector.load %arg3[%c0_1, %c0_2] : memref<64x32xf32, #tpu.memory_space<vmem>>, vector<64x32xf32>
    %cst = arith.constant dense<0.000000e+00> : vector<16x32xf32>
    %7 = tpu.matmul %5, %6, %cst {dimension_numbers = #tpu.dot_dimension_numbers<[1], [0], [0], [1], [0, 0, 1, 1], [], []>} : vector<16x64xf32>, vector<64x32xf32>, vector<16x32xf32> -> vector<16x32xf32>
    %c0_3 = arith.constant 0 : index
    %c0_4 = arith.constant 0 : index
    %8 = vector.load %arg2[%c0_3, %c0_4] : memref<16x8xf32, #tpu.memory_space<vmem>>, vector<16x8xf32>
    %c0_5 = arith.constant 0 : index
    %c0_6 = arith.constant 0 : index
    %9 = vector.load %arg4[%c0_5, %c0_6] : memref<32x32xf32, #tpu.memory_space<vmem>>, vector<8x32xf32>
    %cst_7 = arith.constant dense<0.000000e+00> : vector<16x32xf32>
    %10 = tpu.matmul %8, %9, %cst_7 {dimension_numbers = #tpu.dot_dimension_numbers<[1], [0], [0], [1], [0, 0, 1, 1], [], []>} : vector<16x8xf32>, vector<8x32xf32>, vector<16x32xf32> -> vector<16x32xf32>
    %11 = arith.addf %7, %10 : vector<16x32xf32>
    %c0_8 = arith.constant 0 : index
    %c0_9 = arith.constant 0 : index
    %12 = vector.load %arg1[%c0_8, %c0_9] : memref<16x16xf32, #tpu.memory_space<vmem>>, vector<16x16xf32>
    %c0_10 = arith.constant 0 : index
    %c0_11 = arith.constant 0 : index
    %c0_12 = arith.constant 0 : index
    %13 = vector.load %arg5[%c0_10, %c0_11, %c0_12] : memref<2x6x32xf32, #tpu.memory_space<vmem>>, vector<1x6x32xf32>
    %14 = vector.shape_cast %13 : vector<1x6x32xf32> to vector<6x32xf32>
    %15 = vector.extract_strided_slice %14 {offsets = [0, 0], sizes = [1, 32], strides = [1, 1]} : vector<6x32xf32> to vector<1x32xf32>
    %16 = vector.shape_cast %15 : vector<1x32xf32> to vector<32xf32>
    %17 = vector.extract_strided_slice %14 {offsets = [1, 0], sizes = [1, 32], strides = [1, 1]} : vector<6x32xf32> to vector<1x32xf32>
    %18 = vector.shape_cast %17 : vector<1x32xf32> to vector<32xf32>
    %cst_13 = arith.constant dense<0.000000e+00> : vector<16xf32>
    %19 = vector.multi_reduction <add>, %11, %cst_13 [1] : vector<16x32xf32> to vector<16xf32>
    %20 = vector.shape_cast %19 : vector<16xf32> to vector<16x1xf32>
    %cst_14 = arith.constant 3.200000e+01 : f32
    %21 = vector.broadcast %cst_14 : f32 to vector<16x1xf32>
    %22 = arith.divf %20, %21 : vector<16x1xf32>
    %23 = vector.broadcast %22 : vector<16x1xf32> to vector<16x32xf32>
    %24 = arith.subf %11, %23 : vector<16x32xf32>
    %25 = arith.mulf %24, %24 : vector<16x32xf32>
    %cst_15 = arith.constant dense<0.000000e+00> : vector<16xf32>
    %26 = vector.multi_reduction <add>, %25, %cst_15 [1] : vector<16x32xf32> to vector<16xf32>
    %27 = vector.shape_cast %26 : vector<16xf32> to vector<16x1xf32>
    %cst_16 = arith.constant 3.200000e+01 : f32
    %28 = vector.broadcast %cst_16 : f32 to vector<16x1xf32>
    %29 = arith.divf %27, %28 : vector<16x1xf32>
    %30 = vector.broadcast %22 : vector<16x1xf32> to vector<16x32xf32>
    %31 = arith.subf %11, %30 : vector<16x32xf32>
    %cst_17 = arith.constant 9.99999974E-6 : f32
    %32 = vector.broadcast %cst_17 : f32 to vector<16x1xf32>
    %33 = arith.addf %29, %32 : vector<16x1xf32>
    %34 = math.rsqrt %33 : vector<16x1xf32>
    %35 = vector.broadcast %34 : vector<16x1xf32> to vector<16x32xf32>
    %36 = arith.mulf %31, %35 : vector<16x32xf32>
    %37 = vector.shape_cast %16 : vector<32xf32> to vector<1x32xf32>
    %38 = vector.broadcast %37 : vector<1x32xf32> to vector<16x32xf32>
    %39 = arith.mulf %36, %38 : vector<16x32xf32>
    %40 = vector.shape_cast %18 : vector<32xf32> to vector<1x32xf32>
    %41 = vector.broadcast %40 : vector<1x32xf32> to vector<16x32xf32>
    %42 = arith.addf %39, %41 : vector<16x32xf32>
    %c0_18 = arith.constant 0 : index
    %c0_19 = arith.constant 0 : index
    %c0_20 = arith.constant 0 : index
    %43 = vector.load %arg6[%c0_18, %c0_19, %c0_20] : memref<2x32x96xf32, #tpu.memory_space<vmem>>, vector<1x32x96xf32>
    %44 = vector.shape_cast %43 : vector<1x32x96xf32> to vector<32x96xf32>
    %cst_21 = arith.constant dense<0.000000e+00> : vector<16x96xf32>
    %45 = tpu.matmul %42, %44, %cst_21 {dimension_numbers = #tpu.dot_dimension_numbers<[1], [0], [0], [1], [0, 0, 1, 1], [], []>} : vector<16x32xf32>, vector<32x96xf32>, vector<16x96xf32> -> vector<16x96xf32>
    %c0_22 = arith.constant 0 : index
    %c0_23 = arith.constant 0 : index
    %46 = vector.load %arg7[%c0_22, %c0_23] : memref<2x96xf32, #tpu.memory_space<vmem>>, vector<1x96xf32>
    %47 = vector.shape_cast %46 : vector<1x96xf32> to vector<96xf32>
    %48 = vector.shape_cast %47 : vector<96xf32> to vector<1x96xf32>
    %49 = vector.broadcast %48 : vector<1x96xf32> to vector<16x96xf32>
    %50 = arith.addf %45, %49 : vector<16x96xf32>
    %c0_24 = arith.constant 0 : index
    %c0_25 = arith.constant 0 : index
    %c0_26 = arith.constant 0 : index
    %c0_27 = arith.constant 0 : index
    %51 = vector.load %arg8[%c0_24, %c0_25, %c0_26, %c0_27] : memref<2x2x16x32xf32, #tpu.memory_space<vmem>>, vector<1x2x16x32xf32>
    %52 = vector.shape_cast %51 : vector<1x2x16x32xf32> to vector<2x16x32xf32>
    %cst_28 = arith.constant 0.000000e+00 : f32
    %53 = vector.broadcast %cst_28 : f32 to vector<16x32xf32>
    %54 = vector.extract_strided_slice %50 {offsets = [0, 0], sizes = [16, 16], strides = [1, 1]} : vector<16x96xf32> to vector<16x16xf32>
    %55 = vector.extract_strided_slice %50 {offsets = [0, 32], sizes = [16, 16], strides = [1, 1]} : vector<16x96xf32> to vector<16x16xf32>
    %56 = vector.extract_strided_slice %50 {offsets = [0, 64], sizes = [16, 16], strides = [1, 1]} : vector<16x96xf32> to vector<16x16xf32>
    %cst_29 = arith.constant dense<0.000000e+00> : vector<16x16xf32>
    %57 = tpu.matmul %54, %55, %cst_29 {dimension_numbers = #tpu.dot_dimension_numbers<[1], [1], [0], [0], [0, 0, 1, 0], [], []>} : vector<16x16xf32>, vector<16x16xf32>, vector<16x16xf32> -> vector<16x16xf32>
    %cst_30 = arith.constant 2.500000e-01 : f32
    %58 = vector.broadcast %cst_30 : f32 to vector<16x16xf32>
    %59 = arith.mulf %57, %58 : vector<16x16xf32>
    %60 = arith.addf %59, %12 : vector<16x16xf32>
    %cst_31 = arith.constant dense<0xFF800000> : vector<16xf32>
    %61 = vector.multi_reduction <maximumf>, %60, %cst_31 [1] : vector<16x16xf32> to vector<16xf32>
    %62 = vector.shape_cast %61 : vector<16xf32> to vector<16x1xf32>
    %63 = vector.broadcast %62 : vector<16x1xf32> to vector<16x16xf32>
    %64 = arith.subf %60, %63 : vector<16x16xf32>
    %65 = math.exp %64 : vector<16x16xf32>
    %cst_32 = arith.constant dense<0.000000e+00> : vector<16xf32>
    %66 = vector.multi_reduction <add>, %65, %cst_32 [1] : vector<16x16xf32> to vector<16xf32>
    %67 = vector.shape_cast %66 : vector<16xf32> to vector<16x1xf32>
    %68 = tpu.reciprocal %67 {approx = true} : vector<16x1xf32> -> vector<16x1xf32>
    %69 = vector.broadcast %68 : vector<16x1xf32> to vector<16x16xf32>
    %70 = arith.mulf %65, %69 : vector<16x16xf32>
    %cst_33 = arith.constant dense<0.000000e+00> : vector<16x16xf32>
    %71 = tpu.matmul %70, %56, %cst_33 {dimension_numbers = #tpu.dot_dimension_numbers<[1], [0], [0], [1], [0, 0, 1, 1], [], []>} : vector<16x16xf32>, vector<16x16xf32>, vector<16x16xf32> -> vector<16x16xf32>
    %72 = vector.extract_strided_slice %52 {offsets = [0, 0, 0], sizes = [1, 16, 32], strides = [1, 1, 1]} : vector<2x16x32xf32> to vector<1x16x32xf32>
    %73 = vector.shape_cast %72 : vector<1x16x32xf32> to vector<16x32xf32>
    %cst_34 = arith.constant dense<0.000000e+00> : vector<16x32xf32>
    %74 = tpu.matmul %71, %73, %cst_34 {dimension_numbers = #tpu.dot_dimension_numbers<[1], [0], [0], [1], [0, 0, 1, 1], [], []>} : vector<16x16xf32>, vector<16x32xf32>, vector<16x32xf32> -> vector<16x32xf32>
    %75 = arith.addf %53, %74 : vector<16x32xf32>
    %76 = vector.extract_strided_slice %50 {offsets = [0, 16], sizes = [16, 16], strides = [1, 1]} : vector<16x96xf32> to vector<16x16xf32>
    %77 = vector.extract_strided_slice %50 {offsets = [0, 48], sizes = [16, 16], strides = [1, 1]} : vector<16x96xf32> to vector<16x16xf32>
    %78 = vector.extract_strided_slice %50 {offsets = [0, 80], sizes = [16, 16], strides = [1, 1]} : vector<16x96xf32> to vector<16x16xf32>
    %cst_35 = arith.constant dense<0.000000e+00> : vector<16x16xf32>
    %79 = tpu.matmul %76, %77, %cst_35 {dimension_numbers = #tpu.dot_dimension_numbers<[1], [1], [0], [0], [0, 0, 1, 0], [], []>} : vector<16x16xf32>, vector<16x16xf32>, vector<16x16xf32> -> vector<16x16xf32>
    %cst_36 = arith.constant 2.500000e-01 : f32
    %80 = vector.broadcast %cst_36 : f32 to vector<16x16xf32>
    %81 = arith.mulf %79, %80 : vector<16x16xf32>
    %82 = arith.addf %81, %12 : vector<16x16xf32>
    %cst_37 = arith.constant dense<0xFF800000> : vector<16xf32>
    %83 = vector.multi_reduction <maximumf>, %82, %cst_37 [1] : vector<16x16xf32> to vector<16xf32>
    %84 = vector.shape_cast %83 : vector<16xf32> to vector<16x1xf32>
    %85 = vector.broadcast %84 : vector<16x1xf32> to vector<16x16xf32>
    %86 = arith.subf %82, %85 : vector<16x16xf32>
    %87 = math.exp %86 : vector<16x16xf32>
    %cst_38 = arith.constant dense<0.000000e+00> : vector<16xf32>
    %88 = vector.multi_reduction <add>, %87, %cst_38 [1] : vector<16x16xf32> to vector<16xf32>
    %89 = vector.shape_cast %88 : vector<16xf32> to vector<16x1xf32>
    %90 = tpu.reciprocal %89 {approx = true} : vector<16x1xf32> -> vector<16x1xf32>
    %91 = vector.broadcast %90 : vector<16x1xf32> to vector<16x16xf32>
    %92 = arith.mulf %87, %91 : vector<16x16xf32>
    %cst_39 = arith.constant dense<0.000000e+00> : vector<16x16xf32>
    %93 = tpu.matmul %92, %78, %cst_39 {dimension_numbers = #tpu.dot_dimension_numbers<[1], [0], [0], [1], [0, 0, 1, 1], [], []>} : vector<16x16xf32>, vector<16x16xf32>, vector<16x16xf32> -> vector<16x16xf32>
    %94 = vector.extract_strided_slice %52 {offsets = [1, 0, 0], sizes = [1, 16, 32], strides = [1, 1, 1]} : vector<2x16x32xf32> to vector<1x16x32xf32>
    %95 = vector.shape_cast %94 : vector<1x16x32xf32> to vector<16x32xf32>
    %cst_40 = arith.constant dense<0.000000e+00> : vector<16x32xf32>
    %96 = tpu.matmul %93, %95, %cst_40 {dimension_numbers = #tpu.dot_dimension_numbers<[1], [0], [0], [1], [0, 0, 1, 1], [], []>} : vector<16x16xf32>, vector<16x32xf32>, vector<16x32xf32> -> vector<16x32xf32>
    %97 = arith.addf %75, %96 : vector<16x32xf32>
    %98 = arith.addf %11, %97 : vector<16x32xf32>
    %99 = vector.extract_strided_slice %14 {offsets = [4, 0], sizes = [1, 32], strides = [1, 1]} : vector<6x32xf32> to vector<1x32xf32>
    %100 = vector.shape_cast %99 : vector<1x32xf32> to vector<32xf32>
    %101 = vector.shape_cast %100 : vector<32xf32> to vector<1x32xf32>
    %102 = vector.broadcast %101 : vector<1x32xf32> to vector<16x32xf32>
    %103 = arith.addf %98, %102 : vector<16x32xf32>
    %104 = vector.extract_strided_slice %14 {offsets = [2, 0], sizes = [1, 32], strides = [1, 1]} : vector<6x32xf32> to vector<1x32xf32>
    %105 = vector.shape_cast %104 : vector<1x32xf32> to vector<32xf32>
    %106 = vector.extract_strided_slice %14 {offsets = [3, 0], sizes = [1, 32], strides = [1, 1]} : vector<6x32xf32> to vector<1x32xf32>
    %107 = vector.shape_cast %106 : vector<1x32xf32> to vector<32xf32>
    %cst_41 = arith.constant dense<0.000000e+00> : vector<16xf32>
    %108 = vector.multi_reduction <add>, %103, %cst_41 [1] : vector<16x32xf32> to vector<16xf32>
    %109 = vector.shape_cast %108 : vector<16xf32> to vector<16x1xf32>
    %cst_42 = arith.constant 3.200000e+01 : f32
    %110 = vector.broadcast %cst_42 : f32 to vector<16x1xf32>
    %111 = arith.divf %109, %110 : vector<16x1xf32>
    %112 = vector.broadcast %111 : vector<16x1xf32> to vector<16x32xf32>
    %113 = arith.subf %103, %112 : vector<16x32xf32>
    %114 = arith.mulf %113, %113 : vector<16x32xf32>
    %cst_43 = arith.constant dense<0.000000e+00> : vector<16xf32>
    %115 = vector.multi_reduction <add>, %114, %cst_43 [1] : vector<16x32xf32> to vector<16xf32>
    %116 = vector.shape_cast %115 : vector<16xf32> to vector<16x1xf32>
    %cst_44 = arith.constant 3.200000e+01 : f32
    %117 = vector.broadcast %cst_44 : f32 to vector<16x1xf32>
    %118 = arith.divf %116, %117 : vector<16x1xf32>
    %119 = vector.broadcast %111 : vector<16x1xf32> to vector<16x32xf32>
    %120 = arith.subf %103, %119 : vector<16x32xf32>
    %cst_45 = arith.constant 9.99999974E-6 : f32
    %121 = vector.broadcast %cst_45 : f32 to vector<16x1xf32>
    %122 = arith.addf %118, %121 : vector<16x1xf32>
    %123 = math.rsqrt %122 : vector<16x1xf32>
    %124 = vector.broadcast %123 : vector<16x1xf32> to vector<16x32xf32>
    %125 = arith.mulf %120, %124 : vector<16x32xf32>
    %126 = vector.shape_cast %105 : vector<32xf32> to vector<1x32xf32>
    %127 = vector.broadcast %126 : vector<1x32xf32> to vector<16x32xf32>
    %128 = arith.mulf %125, %127 : vector<16x32xf32>
    %129 = vector.shape_cast %107 : vector<32xf32> to vector<1x32xf32>
    %130 = vector.broadcast %129 : vector<1x32xf32> to vector<16x32xf32>
    %131 = arith.addf %128, %130 : vector<16x32xf32>
    %c0_46 = arith.constant 0 : index
    %c0_47 = arith.constant 0 : index
    %c0_48 = arith.constant 0 : index
    %132 = vector.load %arg9[%c0_46, %c0_47, %c0_48] : memref<2x32x128xf32, #tpu.memory_space<vmem>>, vector<1x32x128xf32>
    %133 = vector.shape_cast %132 : vector<1x32x128xf32> to vector<32x128xf32>
    %cst_49 = arith.constant dense<0.000000e+00> : vector<16x128xf32>
    %134 = tpu.matmul %131, %133, %cst_49 {dimension_numbers = #tpu.dot_dimension_numbers<[1], [0], [0], [1], [0, 0, 1, 1], [], []>} : vector<16x32xf32>, vector<32x128xf32>, vector<16x128xf32> -> vector<16x128xf32>
    %c0_50 = arith.constant 0 : index
    %c0_51 = arith.constant 0 : index
    %135 = vector.load %arg10[%c0_50, %c0_51] : memref<2x128xf32, #tpu.memory_space<vmem>>, vector<1x128xf32>
    %136 = vector.shape_cast %135 : vector<1x128xf32> to vector<128xf32>
    %137 = vector.shape_cast %136 : vector<128xf32> to vector<1x128xf32>
    %138 = vector.broadcast %137 : vector<1x128xf32> to vector<16x128xf32>
    %139 = arith.addf %134, %138 : vector<16x128xf32>
    %cst_52 = arith.constant 5.000000e-01 : f32
    %140 = vector.broadcast %cst_52 : f32 to vector<16x128xf32>
    %141 = arith.mulf %140, %139 : vector<16x128xf32>
    %cst_53 = arith.constant 4.471500e-02 : f32
    %142 = vector.broadcast %cst_53 : f32 to vector<16x128xf32>
    %143 = arith.mulf %142, %139 : vector<16x128xf32>
    %144 = arith.mulf %143, %139 : vector<16x128xf32>
    %145 = arith.mulf %144, %139 : vector<16x128xf32>
    %146 = arith.addf %139, %145 : vector<16x128xf32>
    %cst_54 = arith.constant 0.797884583 : f32
    %147 = vector.broadcast %cst_54 : f32 to vector<16x128xf32>
    %148 = arith.mulf %147, %146 : vector<16x128xf32>
    %149 = math.tanh %148 : vector<16x128xf32>
    %cst_55 = arith.constant 1.000000e+00 : f32
    %150 = vector.broadcast %cst_55 : f32 to vector<16x128xf32>
    %151 = arith.addf %150, %149 : vector<16x128xf32>
    %152 = arith.mulf %141, %151 : vector<16x128xf32>
    %c0_56 = arith.constant 0 : index
    %c0_57 = arith.constant 0 : index
    %c0_58 = arith.constant 0 : index
    %153 = vector.load %arg11[%c0_56, %c0_57, %c0_58] : memref<2x128x32xf32, #tpu.memory_space<vmem>>, vector<1x128x32xf32>
    %154 = vector.shape_cast %153 : vector<1x128x32xf32> to vector<128x32xf32>
    %cst_59 = arith.constant dense<0.000000e+00> : vector<16x32xf32>
    %155 = tpu.matmul %152, %154, %cst_59 {dimension_numbers = #tpu.dot_dimension_numbers<[1], [0], [0], [1], [0, 0, 1, 1], [], []>} : vector<16x128xf32>, vector<128x32xf32>, vector<16x32xf32> -> vector<16x32xf32>
    %156 = arith.addf %103, %155 : vector<16x32xf32>
    %157 = vector.extract_strided_slice %14 {offsets = [5, 0], sizes = [1, 32], strides = [1, 1]} : vector<6x32xf32> to vector<1x32xf32>
    %158 = vector.shape_cast %157 : vector<1x32xf32> to vector<32xf32>
    %159 = vector.shape_cast %158 : vector<32xf32> to vector<1x32xf32>
    %160 = vector.broadcast %159 : vector<1x32xf32> to vector<16x32xf32>
    %161 = arith.addf %156, %160 : vector<16x32xf32>
    %c1 = arith.constant 1 : index
    %c0_60 = arith.constant 0 : index
    %c0_61 = arith.constant 0 : index
    %162 = vector.load %arg5[%c1, %c0_60, %c0_61] : memref<2x6x32xf32, #tpu.memory_space<vmem>>, vector<1x6x32xf32>
    %163 = vector.shape_cast %162 : vector<1x6x32xf32> to vector<6x32xf32>
    %164 = vector.extract_strided_slice %163 {offsets = [0, 0], sizes = [1, 32], strides = [1, 1]} : vector<6x32xf32> to vector<1x32xf32>
    %165 = vector.shape_cast %164 : vector<1x32xf32> to vector<32xf32>
    %166 = vector.extract_strided_slice %163 {offsets = [1, 0], sizes = [1, 32], strides = [1, 1]} : vector<6x32xf32> to vector<1x32xf32>
    %167 = vector.shape_cast %166 : vector<1x32xf32> to vector<32xf32>
    %cst_62 = arith.constant dense<0.000000e+00> : vector<16xf32>
    %168 = vector.multi_reduction <add>, %161, %cst_62 [1] : vector<16x32xf32> to vector<16xf32>
    %169 = vector.shape_cast %168 : vector<16xf32> to vector<16x1xf32>
    %cst_63 = arith.constant 3.200000e+01 : f32
    %170 = vector.broadcast %cst_63 : f32 to vector<16x1xf32>
    %171 = arith.divf %169, %170 : vector<16x1xf32>
    %172 = vector.broadcast %171 : vector<16x1xf32> to vector<16x32xf32>
    %173 = arith.subf %161, %172 : vector<16x32xf32>
    %174 = arith.mulf %173, %173 : vector<16x32xf32>
    %cst_64 = arith.constant dense<0.000000e+00> : vector<16xf32>
    %175 = vector.multi_reduction <add>, %174, %cst_64 [1] : vector<16x32xf32> to vector<16xf32>
    %176 = vector.shape_cast %175 : vector<16xf32> to vector<16x1xf32>
    %cst_65 = arith.constant 3.200000e+01 : f32
    %177 = vector.broadcast %cst_65 : f32 to vector<16x1xf32>
    %178 = arith.divf %176, %177 : vector<16x1xf32>
    %179 = vector.broadcast %171 : vector<16x1xf32> to vector<16x32xf32>
    %180 = arith.subf %161, %179 : vector<16x32xf32>
    %cst_66 = arith.constant 9.99999974E-6 : f32
    %181 = vector.broadcast %cst_66 : f32 to vector<16x1xf32>
    %182 = arith.addf %178, %181 : vector<16x1xf32>
    %183 = math.rsqrt %182 : vector<16x1xf32>
    %184 = vector.broadcast %183 : vector<16x1xf32> to vector<16x32xf32>
    %185 = arith.mulf %180, %184 : vector<16x32xf32>
    %186 = vector.shape_cast %165 : vector<32xf32> to vector<1x32xf32>
    %187 = vector.broadcast %186 : vector<1x32xf32> to vector<16x32xf32>
    %188 = arith.mulf %185, %187 : vector<16x32xf32>
    %189 = vector.shape_cast %167 : vector<32xf32> to vector<1x32xf32>
    %190 = vector.broadcast %189 : vector<1x32xf32> to vector<16x32xf32>
    %191 = arith.addf %188, %190 : vector<16x32xf32>
    %c1_67 = arith.constant 1 : index
    %c0_68 = arith.constant 0 : index
    %c0_69 = arith.constant 0 : index
    %192 = vector.load %arg6[%c1_67, %c0_68, %c0_69] : memref<2x32x96xf32, #tpu.memory_space<vmem>>, vector<1x32x96xf32>
    %193 = vector.shape_cast %192 : vector<1x32x96xf32> to vector<32x96xf32>
    %cst_70 = arith.constant dense<0.000000e+00> : vector<16x96xf32>
    %194 = tpu.matmul %191, %193, %cst_70 {dimension_numbers = #tpu.dot_dimension_numbers<[1], [0], [0], [1], [0, 0, 1, 1], [], []>} : vector<16x32xf32>, vector<32x96xf32>, vector<16x96xf32> -> vector<16x96xf32>
    %c1_71 = arith.constant 1 : index
    %c0_72 = arith.constant 0 : index
    %195 = vector.load %arg7[%c1_71, %c0_72] : memref<2x96xf32, #tpu.memory_space<vmem>>, vector<1x96xf32>
    %196 = vector.shape_cast %195 : vector<1x96xf32> to vector<96xf32>
    %197 = vector.shape_cast %196 : vector<96xf32> to vector<1x96xf32>
    %198 = vector.broadcast %197 : vector<1x96xf32> to vector<16x96xf32>
    %199 = arith.addf %194, %198 : vector<16x96xf32>
    %c1_73 = arith.constant 1 : index
    %c0_74 = arith.constant 0 : index
    %c0_75 = arith.constant 0 : index
    %c0_76 = arith.constant 0 : index
    %200 = vector.load %arg8[%c1_73, %c0_74, %c0_75, %c0_76] : memref<2x2x16x32xf32, #tpu.memory_space<vmem>>, vector<1x2x16x32xf32>
    %201 = vector.shape_cast %200 : vector<1x2x16x32xf32> to vector<2x16x32xf32>
    %cst_77 = arith.constant 0.000000e+00 : f32
    %202 = vector.broadcast %cst_77 : f32 to vector<16x32xf32>
    %203 = vector.extract_strided_slice %199 {offsets = [0, 0], sizes = [16, 16], strides = [1, 1]} : vector<16x96xf32> to vector<16x16xf32>
    %204 = vector.extract_strided_slice %199 {offsets = [0, 32], sizes = [16, 16], strides = [1, 1]} : vector<16x96xf32> to vector<16x16xf32>
    %205 = vector.extract_strided_slice %199 {offsets = [0, 64], sizes = [16, 16], strides = [1, 1]} : vector<16x96xf32> to vector<16x16xf32>
    %cst_78 = arith.constant dense<0.000000e+00> : vector<16x16xf32>
    %206 = tpu.matmul %203, %204, %cst_78 {dimension_numbers = #tpu.dot_dimension_numbers<[1], [1], [0], [0], [0, 0, 1, 0], [], []>} : vector<16x16xf32>, vector<16x16xf32>, vector<16x16xf32> -> vector<16x16xf32>
    %cst_79 = arith.constant 2.500000e-01 : f32
    %207 = vector.broadcast %cst_79 : f32 to vector<16x16xf32>
    %208 = arith.mulf %206, %207 : vector<16x16xf32>
    %209 = arith.addf %208, %12 : vector<16x16xf32>
    %cst_80 = arith.constant dense<0xFF800000> : vector<16xf32>
    %210 = vector.multi_reduction <maximumf>, %209, %cst_80 [1] : vector<16x16xf32> to vector<16xf32>
    %211 = vector.shape_cast %210 : vector<16xf32> to vector<16x1xf32>
    %212 = vector.broadcast %211 : vector<16x1xf32> to vector<16x16xf32>
    %213 = arith.subf %209, %212 : vector<16x16xf32>
    %214 = math.exp %213 : vector<16x16xf32>
    %cst_81 = arith.constant dense<0.000000e+00> : vector<16xf32>
    %215 = vector.multi_reduction <add>, %214, %cst_81 [1] : vector<16x16xf32> to vector<16xf32>
    %216 = vector.shape_cast %215 : vector<16xf32> to vector<16x1xf32>
    %217 = tpu.reciprocal %216 {approx = true} : vector<16x1xf32> -> vector<16x1xf32>
    %218 = vector.broadcast %217 : vector<16x1xf32> to vector<16x16xf32>
    %219 = arith.mulf %214, %218 : vector<16x16xf32>
    %cst_82 = arith.constant dense<0.000000e+00> : vector<16x16xf32>
    %220 = tpu.matmul %219, %205, %cst_82 {dimension_numbers = #tpu.dot_dimension_numbers<[1], [0], [0], [1], [0, 0, 1, 1], [], []>} : vector<16x16xf32>, vector<16x16xf32>, vector<16x16xf32> -> vector<16x16xf32>
    %221 = vector.extract_strided_slice %201 {offsets = [0, 0, 0], sizes = [1, 16, 32], strides = [1, 1, 1]} : vector<2x16x32xf32> to vector<1x16x32xf32>
    %222 = vector.shape_cast %221 : vector<1x16x32xf32> to vector<16x32xf32>
    %cst_83 = arith.constant dense<0.000000e+00> : vector<16x32xf32>
    %223 = tpu.matmul %220, %222, %cst_83 {dimension_numbers = #tpu.dot_dimension_numbers<[1], [0], [0], [1], [0, 0, 1, 1], [], []>} : vector<16x16xf32>, vector<16x32xf32>, vector<16x32xf32> -> vector<16x32xf32>
    %224 = arith.addf %202, %223 : vector<16x32xf32>
    %225 = vector.extract_strided_slice %199 {offsets = [0, 16], sizes = [16, 16], strides = [1, 1]} : vector<16x96xf32> to vector<16x16xf32>
    %226 = vector.extract_strided_slice %199 {offsets = [0, 48], sizes = [16, 16], strides = [1, 1]} : vector<16x96xf32> to vector<16x16xf32>
    %227 = vector.extract_strided_slice %199 {offsets = [0, 80], sizes = [16, 16], strides = [1, 1]} : vector<16x96xf32> to vector<16x16xf32>
    %cst_84 = arith.constant dense<0.000000e+00> : vector<16x16xf32>
    %228 = tpu.matmul %225, %226, %cst_84 {dimension_numbers = #tpu.dot_dimension_numbers<[1], [1], [0], [0], [0, 0, 1, 0], [], []>} : vector<16x16xf32>, vector<16x16xf32>, vector<16x16xf32> -> vector<16x16xf32>
    %cst_85 = arith.constant 2.500000e-01 : f32
    %229 = vector.broadcast %cst_85 : f32 to vector<16x16xf32>
    %230 = arith.mulf %228, %229 : vector<16x16xf32>
    %231 = arith.addf %230, %12 : vector<16x16xf32>
    %cst_86 = arith.constant dense<0xFF800000> : vector<16xf32>
    %232 = vector.multi_reduction <maximumf>, %231, %cst_86 [1] : vector<16x16xf32> to vector<16xf32>
    %233 = vector.shape_cast %232 : vector<16xf32> to vector<16x1xf32>
    %234 = vector.broadcast %233 : vector<16x1xf32> to vector<16x16xf32>
    %235 = arith.subf %231, %234 : vector<16x16xf32>
    %236 = math.exp %235 : vector<16x16xf32>
    %cst_87 = arith.constant dense<0.000000e+00> : vector<16xf32>
    %237 = vector.multi_reduction <add>, %236, %cst_87 [1] : vector<16x16xf32> to vector<16xf32>
    %238 = vector.shape_cast %237 : vector<16xf32> to vector<16x1xf32>
    %239 = tpu.reciprocal %238 {approx = true} : vector<16x1xf32> -> vector<16x1xf32>
    %240 = vector.broadcast %239 : vector<16x1xf32> to vector<16x16xf32>
    %241 = arith.mulf %236, %240 : vector<16x16xf32>
    %cst_88 = arith.constant dense<0.000000e+00> : vector<16x16xf32>
    %242 = tpu.matmul %241, %227, %cst_88 {dimension_numbers = #tpu.dot_dimension_numbers<[1], [0], [0], [1], [0, 0, 1, 1], [], []>} : vector<16x16xf32>, vector<16x16xf32>, vector<16x16xf32> -> vector<16x16xf32>
    %243 = vector.extract_strided_slice %201 {offsets = [1, 0, 0], sizes = [1, 16, 32], strides = [1, 1, 1]} : vector<2x16x32xf32> to vector<1x16x32xf32>
    %244 = vector.shape_cast %243 : vector<1x16x32xf32> to vector<16x32xf32>
    %cst_89 = arith.constant dense<0.000000e+00> : vector<16x32xf32>
    %245 = tpu.matmul %242, %244, %cst_89 {dimension_numbers = #tpu.dot_dimension_numbers<[1], [0], [0], [1], [0, 0, 1, 1], [], []>} : vector<16x16xf32>, vector<16x32xf32>, vector<16x32xf32> -> vector<16x32xf32>
    %246 = arith.addf %224, %245 : vector<16x32xf32>
    %247 = arith.addf %161, %246 : vector<16x32xf32>
    %248 = vector.extract_strided_slice %163 {offsets = [4, 0], sizes = [1, 32], strides = [1, 1]} : vector<6x32xf32> to vector<1x32xf32>
    %249 = vector.shape_cast %248 : vector<1x32xf32> to vector<32xf32>
    %250 = vector.shape_cast %249 : vector<32xf32> to vector<1x32xf32>
    %251 = vector.broadcast %250 : vector<1x32xf32> to vector<16x32xf32>
    %252 = arith.addf %247, %251 : vector<16x32xf32>
    %253 = vector.extract_strided_slice %163 {offsets = [2, 0], sizes = [1, 32], strides = [1, 1]} : vector<6x32xf32> to vector<1x32xf32>
    %254 = vector.shape_cast %253 : vector<1x32xf32> to vector<32xf32>
    %255 = vector.extract_strided_slice %163 {offsets = [3, 0], sizes = [1, 32], strides = [1, 1]} : vector<6x32xf32> to vector<1x32xf32>
    %256 = vector.shape_cast %255 : vector<1x32xf32> to vector<32xf32>
    %cst_90 = arith.constant dense<0.000000e+00> : vector<16xf32>
    %257 = vector.multi_reduction <add>, %252, %cst_90 [1] : vector<16x32xf32> to vector<16xf32>
    %258 = vector.shape_cast %257 : vector<16xf32> to vector<16x1xf32>
    %cst_91 = arith.constant 3.200000e+01 : f32
    %259 = vector.broadcast %cst_91 : f32 to vector<16x1xf32>
    %260 = arith.divf %258, %259 : vector<16x1xf32>
    %261 = vector.broadcast %260 : vector<16x1xf32> to vector<16x32xf32>
    %262 = arith.subf %252, %261 : vector<16x32xf32>
    %263 = arith.mulf %262, %262 : vector<16x32xf32>
    %cst_92 = arith.constant dense<0.000000e+00> : vector<16xf32>
    %264 = vector.multi_reduction <add>, %263, %cst_92 [1] : vector<16x32xf32> to vector<16xf32>
    %265 = vector.shape_cast %264 : vector<16xf32> to vector<16x1xf32>
    %cst_93 = arith.constant 3.200000e+01 : f32
    %266 = vector.broadcast %cst_93 : f32 to vector<16x1xf32>
    %267 = arith.divf %265, %266 : vector<16x1xf32>
    %268 = vector.broadcast %260 : vector<16x1xf32> to vector<16x32xf32>
    %269 = arith.subf %252, %268 : vector<16x32xf32>
    %cst_94 = arith.constant 9.99999974E-6 : f32
    %270 = vector.broadcast %cst_94 : f32 to vector<16x1xf32>
    %271 = arith.addf %267, %270 : vector<16x1xf32>
    %272 = math.rsqrt %271 : vector<16x1xf32>
    %273 = vector.broadcast %272 : vector<16x1xf32> to vector<16x32xf32>
    %274 = arith.mulf %269, %273 : vector<16x32xf32>
    %275 = vector.shape_cast %254 : vector<32xf32> to vector<1x32xf32>
    %276 = vector.broadcast %275 : vector<1x32xf32> to vector<16x32xf32>
    %277 = arith.mulf %274, %276 : vector<16x32xf32>
    %278 = vector.shape_cast %256 : vector<32xf32> to vector<1x32xf32>
    %279 = vector.broadcast %278 : vector<1x32xf32> to vector<16x32xf32>
    %280 = arith.addf %277, %279 : vector<16x32xf32>
    %c1_95 = arith.constant 1 : index
    %c0_96 = arith.constant 0 : index
    %c0_97 = arith.constant 0 : index
    %281 = vector.load %arg9[%c1_95, %c0_96, %c0_97] : memref<2x32x128xf32, #tpu.memory_space<vmem>>, vector<1x32x128xf32>
    %282 = vector.shape_cast %281 : vector<1x32x128xf32> to vector<32x128xf32>
    %cst_98 = arith.constant dense<0.000000e+00> : vector<16x128xf32>
    %283 = tpu.matmul %280, %282, %cst_98 {dimension_numbers = #tpu.dot_dimension_numbers<[1], [0], [0], [1], [0, 0, 1, 1], [], []>} : vector<16x32xf32>, vector<32x128xf32>, vector<16x128xf32> -> vector<16x128xf32>
    %c1_99 = arith.constant 1 : index
    %c0_100 = arith.constant 0 : index
    %284 = vector.load %arg10[%c1_99, %c0_100] : memref<2x128xf32, #tpu.memory_space<vmem>>, vector<1x128xf32>
    %285 = vector.shape_cast %284 : vector<1x128xf32> to vector<128xf32>
    %286 = vector.shape_cast %285 : vector<128xf32> to vector<1x128xf32>
    %287 = vector.broadcast %286 : vector<1x128xf32> to vector<16x128xf32>
    %288 = arith.addf %283, %287 : vector<16x128xf32>
    %cst_101 = arith.constant 5.000000e-01 : f32
    %289 = vector.broadcast %cst_101 : f32 to vector<16x128xf32>
    %290 = arith.mulf %289, %288 : vector<16x128xf32>
    %cst_102 = arith.constant 4.471500e-02 : f32
    %291 = vector.broadcast %cst_102 : f32 to vector<16x128xf32>
    %292 = arith.mulf %291, %288 : vector<16x128xf32>
    %293 = arith.mulf %292, %288 : vector<16x128xf32>
    %294 = arith.mulf %293, %288 : vector<16x128xf32>
    %295 = arith.addf %288, %294 : vector<16x128xf32>
    %cst_103 = arith.constant 0.797884583 : f32
    %296 = vector.broadcast %cst_103 : f32 to vector<16x128xf32>
    %297 = arith.mulf %296, %295 : vector<16x128xf32>
    %298 = math.tanh %297 : vector<16x128xf32>
    %cst_104 = arith.constant 1.000000e+00 : f32
    %299 = vector.broadcast %cst_104 : f32 to vector<16x128xf32>
    %300 = arith.addf %299, %298 : vector<16x128xf32>
    %301 = arith.mulf %290, %300 : vector<16x128xf32>
    %c1_105 = arith.constant 1 : index
    %c0_106 = arith.constant 0 : index
    %c0_107 = arith.constant 0 : index
    %302 = vector.load %arg11[%c1_105, %c0_106, %c0_107] : memref<2x128x32xf32, #tpu.memory_space<vmem>>, vector<1x128x32xf32>
    %303 = vector.shape_cast %302 : vector<1x128x32xf32> to vector<128x32xf32>
    %cst_108 = arith.constant dense<0.000000e+00> : vector<16x32xf32>
    %304 = tpu.matmul %301, %303, %cst_108 {dimension_numbers = #tpu.dot_dimension_numbers<[1], [0], [0], [1], [0, 0, 1, 1], [], []>} : vector<16x128xf32>, vector<128x32xf32>, vector<16x32xf32> -> vector<16x32xf32>
    %305 = arith.addf %252, %304 : vector<16x32xf32>
    %306 = vector.extract_strided_slice %163 {offsets = [5, 0], sizes = [1, 32], strides = [1, 1]} : vector<6x32xf32> to vector<1x32xf32>
    %307 = vector.shape_cast %306 : vector<1x32xf32> to vector<32xf32>
    %308 = vector.shape_cast %307 : vector<32xf32> to vector<1x32xf32>
    %309 = vector.broadcast %308 : vector<1x32xf32> to vector<16x32xf32>
    %310 = arith.addf %305, %309 : vector<16x32xf32>
    %c0_109 = arith.constant 0 : index
    %c0_110 = arith.constant 0 : index
    %311 = vector.load %arg12[%c0_109, %c0_110] : memref<2x32xf32, #tpu.memory_space<vmem>>, vector<1x32xf32>
    %312 = vector.shape_cast %311 : vector<1x32xf32> to vector<32xf32>
    %c1_111 = arith.constant 1 : index
    %c0_112 = arith.constant 0 : index
    %313 = vector.load %arg12[%c1_111, %c0_112] : memref<2x32xf32, #tpu.memory_space<vmem>>, vector<1x32xf32>
    %314 = vector.shape_cast %313 : vector<1x32xf32> to vector<32xf32>
    %cst_113 = arith.constant dense<0.000000e+00> : vector<16xf32>
    %315 = vector.multi_reduction <add>, %310, %cst_113 [1] : vector<16x32xf32> to vector<16xf32>
    %316 = vector.shape_cast %315 : vector<16xf32> to vector<16x1xf32>
    %cst_114 = arith.constant 3.200000e+01 : f32
    %317 = vector.broadcast %cst_114 : f32 to vector<16x1xf32>
    %318 = arith.divf %316, %317 : vector<16x1xf32>
    %319 = vector.broadcast %318 : vector<16x1xf32> to vector<16x32xf32>
    %320 = arith.subf %310, %319 : vector<16x32xf32>
    %321 = arith.mulf %320, %320 : vector<16x32xf32>
    %cst_115 = arith.constant dense<0.000000e+00> : vector<16xf32>
    %322 = vector.multi_reduction <add>, %321, %cst_115 [1] : vector<16x32xf32> to vector<16xf32>
    %323 = vector.shape_cast %322 : vector<16xf32> to vector<16x1xf32>
    %cst_116 = arith.constant 3.200000e+01 : f32
    %324 = vector.broadcast %cst_116 : f32 to vector<16x1xf32>
    %325 = arith.divf %323, %324 : vector<16x1xf32>
    %326 = vector.broadcast %318 : vector<16x1xf32> to vector<16x32xf32>
    %327 = arith.subf %310, %326 : vector<16x32xf32>
    %cst_117 = arith.constant 9.99999974E-6 : f32
    %328 = vector.broadcast %cst_117 : f32 to vector<16x1xf32>
    %329 = arith.addf %325, %328 : vector<16x1xf32>
    %330 = math.rsqrt %329 : vector<16x1xf32>
    %331 = vector.broadcast %330 : vector<16x1xf32> to vector<16x32xf32>
    %332 = arith.mulf %327, %331 : vector<16x32xf32>
    %333 = vector.shape_cast %312 : vector<32xf32> to vector<1x32xf32>
    %334 = vector.broadcast %333 : vector<1x32xf32> to vector<16x32xf32>
    %335 = arith.mulf %332, %334 : vector<16x32xf32>
    %336 = vector.shape_cast %314 : vector<32xf32> to vector<1x32xf32>
    %337 = vector.broadcast %336 : vector<1x32xf32> to vector<16x32xf32>
    %338 = arith.addf %335, %337 : vector<16x32xf32>
    %c0_118 = arith.constant 0 : index
    %c0_119 = arith.constant 0 : index
    %339 = vector.load %arg13[%c0_118, %c0_119] : memref<32x128xf32, #tpu.memory_space<vmem>>, vector<32x128xf32>
    %cst_120 = arith.constant dense<0.000000e+00> : vector<16x128xf32>
    %340 = tpu.matmul %338, %339, %cst_120 {dimension_numbers = #tpu.dot_dimension_numbers<[1], [0], [0], [1], [0, 0, 1, 1], [], []>} : vector<16x32xf32>, vector<32x128xf32>, vector<16x128xf32> -> vector<16x128xf32>
    %c0_121 = arith.constant 0 : index
    %c0_122 = arith.constant 0 : index
    %341 = vector.load %arg14[%c0_121, %c0_122] : memref<1x128xf32, #tpu.memory_space<vmem>>, vector<1x128xf32>
    %342 = vector.shape_cast %341 : vector<1x128xf32> to vector<128xf32>
    %343 = vector.shape_cast %342 : vector<128xf32> to vector<1x128xf32>
    %344 = vector.broadcast %343 : vector<1x128xf32> to vector<16x128xf32>
    %345 = arith.addf %340, %344 : vector<16x128xf32>
    %c0_123 = arith.constant 0 : index
    %c0_124 = arith.constant 0 : index
    %346 = vector.load %arg15[%c0_123, %c0_124] : memref<16x128xf32, #tpu.memory_space<vmem>>, vector<16x128xf32>
    tpu.vector_store %arg15[%c0_123, %c0_124], %345 {strides = array<i32>} : memref<16x128xf32, #tpu.memory_space<vmem>>, vector<16x128xf32>,
    return
  }
}

</mosaic_0001>

<llo_original>
// kernel: gpt2_classify.1
$region0: #{gpt2_classify.1}
  #allocation0 [shape = 'u32[]', space=smem, size = 0x4, offset = 0x4, fixed_abs, tag = 'smem constant byte address 0x4 - core index']
  #allocation1 [shape = 'u32[144,128]{1,0:T(1,128)}', space=vmem, size = 0x12000, scoped, tag = 'internal scratch']
  %s0 = inlined_call_operand.vmem [shape: s32[16,1], index: 0, kind: input, shape index: {}]
  %s1 = inlined_call_operand.vmem [shape: f32[16,16], index: 1, kind: input, shape index: {}]
  %s2 = inlined_call_operand.vmem [shape: f32[16,8], index: 2, kind: input, shape index: {}]
  %s3 = inlined_call_operand.vmem [shape: f32[64,32], index: 3, kind: input, shape index: {}]
  %s4 = inlined_call_operand.vmem [shape: f32[32,32], index: 4, kind: input, shape index: {}]
  %s5 = inlined_call_operand.vmem [shape: f32[2,6,32], index: 5, kind: input, shape index: {}]
  %s6 = inlined_call_operand.vmem [shape: f32[2,32,96], index: 6, kind: input, shape index: {}]
  %s7 = inlined_call_operand.vmem [shape: f32[2,96], index: 7, kind: input, shape index: {}]
  %s8 = inlined_call_operand.vmem [shape: f32[2,2,16,32], index: 8, kind: input, shape index: {}]
  %s9 = inlined_call_operand.vmem [shape: f32[2,32,128], index: 9, kind: input, shape index: {}]
  %s10 = inlined_call_operand.vmem [shape: f32[2,128], index: 10, kind: input, shape index: {}]
  %s11 = inlined_call_operand.vmem [shape: f32[2,128,32], index: 11, kind: input, shape index: {}]
  %s12 = inlined_call_operand.vmem [shape: f32[2,32], index: 12, kind: input, shape index: {}]
  %s13 = inlined_call_operand.vmem [shape: f32[32,128], index: 13, kind: input, shape index: {}]
  %s14 = inlined_call_operand.vmem [shape: f32[1,128], index: 14, kind: input, shape index: {}]
  %s15 = inlined_call_operand.vmem [shape: f32[16,128], index: 15, kind: output, shape index: {}]
  %s16 = sld [smem:[#allocation0]]
  $region70: #{gpt2_classify.1} parent=0
    _
  %s18 = ssub.s32 1, %s16
  %s19 = scalar_select 0, %s18, %s16
  // Predicated region
  $region2: #{gpt2_classify.1} parent=0 // pred_check
    _
  $region3: #{gpt2_classify.1} parent=0 // pred_check_branch
    %21 = sbr.rel (0) target = $region5
  $region4: #{gpt2_classify.1} parent=0 // pred_region
    _
  $region5: #{gpt2_classify.1} parent=0 // pred_fallthru
    _
  // Predicated region
  $region6: #{gpt2_classify.1} parent=0 // pred_check
    _
  $region7: #{gpt2_classify.1} parent=0 // pred_check_branch
    %23 = sbr.rel (0) target = $region9
  $region8: #{gpt2_classify.1} parent=0 // pred_region
    _
  $region9: #{gpt2_classify.1} parent=0 // pred_fallthru
    _
  // Predicated region
  $region10: #{gpt2_classify.1} parent=0 // pred_check
    _
  $region11: #{gpt2_classify.1} parent=0 // pred_check_branch
    %25 = sbr.rel (0) target = $region13
  $region12: #{gpt2_classify.1} parent=0 // pred_region
    _
  $region13: #{gpt2_classify.1} parent=0 // pred_fallthru
    _
  // Predicated region
  $region14: #{gpt2_classify.1} parent=0 // pred_check
    _
  $region15: #{gpt2_classify.1} parent=0 // pred_check_branch
    %27 = sbr.rel (0) target = $region17
  $region16: #{gpt2_classify.1} parent=0 // pred_region
    _
  $region17: #{gpt2_classify.1} parent=0 // pred_fallthru
    _
  // Predicated region
  $region18: #{gpt2_classify.1} parent=0 // pred_check
    _
  $region19: #{gpt2_classify.1} parent=0 // pred_check_branch
    %29 = sbr.rel (0) target = $region21
  $region20: #{gpt2_classify.1} parent=0 // pred_region
    _
  $region21: #{gpt2_classify.1} parent=0 // pred_fallthru
    _
  // Predicated region
  $region22: #{gpt2_classify.1} parent=0 // pred_check
    _
  $region23: #{gpt2_classify.1} parent=0 // pred_check_branch
    %31 = sbr.rel (0) target = $region25
  $region24: #{gpt2_classify.1} parent=0 // pred_region
    _
  $region25: #{gpt2_classify.1} parent=0 // pred_fallthru
    _
  // Predicated region
  $region26: #{gpt2_classify.1} parent=0 // pred_check
    _
  $region27: #{gpt2_classify.1} parent=0 // pred_check_branch
    %33 = sbr.rel (0) target = $region29
  $region28: #{gpt2_classify.1} parent=0 // pred_region
    _
  $region29: #{gpt2_classify.1} parent=0 // pred_fallthru
    _
  // Predicated region
  $region30: #{gpt2_classify.1} parent=0 // pred_check
    _
  $region31: #{gpt2_classify.1} parent=0 // pred_check_branch
    %35 = sbr.rel (0) target = $region33
  $region32: #{gpt2_classify.1} parent=0 // pred_region
    _
  $region33: #{gpt2_classify.1} parent=0 // pred_fallthru
    _
  // Predicated region
  $region34: #{gpt2_classify.1} parent=0 // pred_check
    _
  $region35: #{gpt2_classify.1} parent=0 // pred_check_branch
    %37 = sbr.rel (0) target = $region37
  $region36: #{gpt2_classify.1} parent=0 // pred_region
    _
  $region37: #{gpt2_classify.1} parent=0 // pred_fallthru
    _
  // Predicated region
  $region38: #{gpt2_classify.1} parent=0 // pred_check
    _
  $region39: #{gpt2_classify.1} parent=0 // pred_check_branch
    %39 = sbr.rel (0) target = $region41
  $region40: #{gpt2_classify.1} parent=0 // pred_region
    _
  $region41: #{gpt2_classify.1} parent=0 // pred_fallthru
    _
  // Predicated region
  $region42: #{gpt2_classify.1} parent=0 // pred_check
    _
  $region43: #{gpt2_classify.1} parent=0 // pred_check_branch
    %41 = sbr.rel (0) target = $region45
  $region44: #{gpt2_classify.1} parent=0 // pred_region
    _
  $region45: #{gpt2_classify.1} parent=0 // pred_fallthru
    _
  // Predicated region
  $region46: #{gpt2_classify.1} parent=0 // pred_check
    _
  $region47: #{gpt2_classify.1} parent=0 // pred_check_branch
    %43 = sbr.rel (0) target = $region49
  $region48: #{gpt2_classify.1} parent=0 // pred_region
    _
  $region49: #{gpt2_classify.1} parent=0 // pred_fallthru
    _
  // Predicated region
  $region50: #{gpt2_classify.1} parent=0 // pred_check
    _
  $region51: #{gpt2_classify.1} parent=0 // pred_check_branch
    %45 = sbr.rel (0) target = $region53
  $region52: #{gpt2_classify.1} parent=0 // pred_region
    _
  $region53: #{gpt2_classify.1} parent=0 // pred_fallthru
    _
  // Predicated region
  $region54: #{gpt2_classify.1} parent=0 // pred_check
    _
  $region55: #{gpt2_classify.1} parent=0 // pred_check_branch
    %47 = sbr.rel (0) target = $region57
  $region56: #{gpt2_classify.1} parent=0 // pred_region
    _
  $region57: #{gpt2_classify.1} parent=0 // pred_fallthru
    _
  // Predicated region
  $region58: #{gpt2_classify.1} parent=0 // pred_check
    _
  $region59: #{gpt2_classify.1} parent=0 // pred_check_branch
    %49 = sbr.rel (0) target = $region61
  $region60: #{gpt2_classify.1} parent=0 // pred_region
    _
  $region61: #{gpt2_classify.1} parent=0 // pred_fallthru
    _
  %v50 = vld [vmem:[%s0] sm:$0xff]
  %v51 = vld [vmem:[%s0 + $0x8] sm:$0xff]
  %v52 = vlaneseq
  %v53 = vand.u32 %v52, 127
  %54 = vset.pattern.permute.xlu0 0
  %55 = vperm.xlu0 %54, %v50
  %v56 = vpop.permute.xlu0 %55
  %57 = vset.pattern.permute.xlu0 0
  %58 = vperm.xlu0 %57, %v51
  %v59 = vpop.permute.xlu0 %58
  %vm60 = vcmp.eq.s32.totalorder %v56, %v53
  %vm61 = vcmp.eq.s32.totalorder %v59, %v53
  %v62 = vsel %vm60, 1, 0
  %v63 = vsel %vm61, 1, 0
  %v64 = vcvt.s32.f32 %v62
  %v65 = vcvt.s32.f32 %v63
  %v66 = vld [vmem:[%s3] sm:$0xff]
  %v67 = vld [vmem:[%s3 + $0x8] sm:$0xff]
  %v68 = vld [vmem:[%s3 + $0x10] sm:$0xff]
  %v69 = vld [vmem:[%s3 + $0x18] sm:$0xff]
  %v70 = vld [vmem:[%s3 + $0x20] sm:$0xff]
  %v71 = vld [vmem:[%s3 + $0x28] sm:$0xff]
  %v72 = vld [vmem:[%s3 + $0x30] sm:$0xff]
  %v73 = vld [vmem:[%s3 + $0x38] sm:$0xff]
  %v74 = vld [vmem:[%s2] sm:$0xff]
  %v75 = vld [vmem:[%s2 + $0x8] sm:$0xff]
  %v76 = vld [vmem:[%s4] sm:$0xff]
  %vm77 = vcmask 64512
  %v79 = vsel %vm77, %v74, 0
  %v82 = vsel %vm77, %v75, 0
  %84 = vmatprep.subr.mxu0 0.0
  %85 = vmatpush1.msra.mxu0 %v76
  %86 = vmatprep.subr.mxu0 0.0
  %87 = vmatpush1.msra.mxu0 0.0
  %88 = vmatprep.subr.mxu0 0.0
  %89 = vmatpush1.msra.mxu0 0.0
  %90 = vmatprep.subr.mxu0 0.0
  %91 = vmatpush1.msra.mxu0 0.0
  %92 = vmatprep.subr.mxu0 0.0
  %93 = vmatpush1.msra.mxu0 0.0
  %94 = vmatprep.subr.mxu0 0.0
  %95 = vmatpush1.msra.mxu0 0.0
  %96 = vmatprep.subr.mxu0 0.0
  %97 = vmatpush1.msra.mxu0 0.0
  %98 = vmatprep.subr.mxu0 0.0
  %99 = vmatpush1.msra.mxu0 0.0
  %100 = vmatprep.subr.mxu0 0.0
  %101 = vmatpush1.msra.mxu0 0.0
  %102 = vmatprep.subr.mxu0 0.0
  %103 = vmatpush1.msra.mxu0 0.0
  %104 = vmatprep.subr.mxu0 0.0
  %105 = vmatpush1.msra.mxu0 0.0
  %106 = vmatprep.subr.mxu0 0.0
  %107 = vmatpush1.msra.mxu0 0.0
  %108 = vmatprep.subr.mxu0 0.0
  %109 = vmatpush1.msra.mxu0 0.0
  %110 = vmatprep.subr.mxu0 0.0
  %111 = vmatpush1.msra.mxu0 0.0
  %112 = vmatprep.subr.mxu0 0.0
  %113 = vmatpush1.msra.mxu0 0.0
  %114 = vmatprep.subr.mxu0 0.0
  %115 = vmatpush1.msra.mxu0 0.0
  %116 = vmatprep.subr.mxu0 0.0
  %117 = vmatpush1.msra.mxu0 0.0
  %118 = vmatprep.subr.mxu0 0.0
  %119 = vmatpush1.msra.mxu0 0.0
  %120 = vmatprep.subr.mxu0 0.0
  %121 = vmatpush1.msra.mxu0 0.0
  %122 = vmatprep.subr.mxu0 0.0
  %123 = vmatpush1.msra.mxu0 0.0
  %124 = vmatprep.subr.mxu0 0.0
  %125 = vmatpush1.msra.mxu0 0.0
  %126 = vmatprep.subr.mxu0 0.0
  %127 = vmatpush1.msra.mxu0 0.0
  %128 = vmatprep.subr.mxu0 0.0
  %129 = vmatpush1.msra.mxu0 0.0
  %130 = vmatprep.subr.mxu0 0.0
  %131 = vmatpush1.msra.mxu0 0.0
  %132 = vmatprep.subr.mxu0 0.0
  %133 = vmatpush1.msra.mxu0 0.0
  %134 = vmatprep.subr.mxu0 0.0
  %135 = vmatpush1.msra.mxu0 0.0
  %136 = vmatprep.subr.mxu0 0.0
  %137 = vmatpush1.msra.mxu0 0.0
  %138 = vmatprep.subr.mxu0 0.0
  %139 = vmatpush1.msra.mxu0 0.0
  %140 = vmatprep.subr.mxu0 0.0
  %141 = vmatpush1.msra.mxu0 0.0
  %142 = vmatprep.subr.mxu0 0.0
  %143 = vmatpush1.msra.mxu0 0.0
  %144 = vmatprep.subr.mxu0 0.0
  %145 = vmatpush1.msra.mxu0 0.0
  %146 = vmatprep.subr.mxu0 0.0
  %147 = vmatpush1.msra.mxu0 0.0
  %148 = vmatprep.mubr.f32.mxu0 0.0
  %149 = vmatmul.mubr.f32.gmra.mrb[0].mxu0 %v79
  %v150 = vpop.f32.mrb[0].mxu0
  %v151 = vadd.f32 0.0, %v150
  %v152 = vpop.f32.mrb[0].mxu0
  %153 = vmatprep.mubr.f32.mxu0 0.0
  %154 = vmatmul.mubr.f32.gmra.mrb[0].mxu0 %v82
  %v155 = vpop.f32.mrb[0].mxu0
  %v156 = vadd.f32 0.0, %v155
  %v157 = vpop.f32.mrb[0].mxu0
  %158 = vdwg.mxu0
  %vm159 = vcmask 523264
  %v161 = vsel %vm159, %v64, 0
  %v164 = vsel %vm159, %v65, 0
  %166 = vmatprep.subr.mxu0 0.0
  %167 = vmatpush1.msra.mxu0 %v66
  %168 = vmatprep.subr.mxu0 0.0
  %169 = vmatpush1.msra.mxu0 %v67
  %170 = vmatprep.subr.mxu0 0.0
  %171 = vmatpush1.msra.mxu0 %v68
  %172 = vmatprep.subr.mxu0 0.0
  %173 = vmatpush1.msra.mxu0 %v69
  %174 = vmatprep.subr.mxu0 0.0
  %175 = vmatpush1.msra.mxu0 %v70
  %176 = vmatprep.subr.mxu0 0.0
  %177 = vmatpush1.msra.mxu0 %v71
  %178 = vmatprep.subr.mxu0 0.0
  %179 = vmatpush1.msra.mxu0 %v72
  %180 = vmatprep.subr.mxu0 0.0
  %181 = vmatpush1.msra.mxu0 %v73
  %182 = vmatprep.subr.mxu0 0.0
  %183 = vmatpush1.msra.mxu0 0.0
  %184 = vmatprep.subr.mxu0 0.0
  %185 = vmatpush1.msra.mxu0 0.0
  %186 = vmatprep.subr.mxu0 0.0
  %187 = vmatpush1.msra.mxu0 0.0
  %188 = vmatprep.subr.mxu0 0.0
  %189 = vmatpush1.msra.mxu0 0.0
  %190 = vmatprep.subr.mxu0 0.0
  %191 = vmatpush1.msra.mxu0 0.0
  %192 = vmatprep.subr.mxu0 0.0
  %193 = vmatpush1.msra.mxu0 0.0
  %194 = vmatprep.subr.mxu0 0.0
  %195 = vmatpush1.msra.mxu0 0.0
  %196 = vmatprep.subr.mxu0 0.0
  %197 = vmatpush1.msra.mxu0 0.0
  %198 = vmatprep.subr.mxu0 0.0
  %199 = vmatpush1.msra.mxu0 0.0
  %200 = vmatprep.subr.mxu0 0.0
  %201 = vmatpush1.msra.mxu0 0.0
  %202 = vmatprep.subr.mxu0 0.0
  %203 = vmatpush1.msra.mxu0 0.0
  %204 = vmatprep.subr.mxu0 0.0
  %205 = vmatpush1.msra.mxu0 0.0
  %206 = vmatprep.subr.mxu0 0.0
  %207 = vmatpush1.msra.mxu0 0.0
  %208 = vmatprep.subr.mxu0 0.0
  %209 = vmatpush1.msra.mxu0 0.0
  %210 = vmatprep.subr.mxu0 0.0
  %211 = vmatpush1.msra.mxu0 0.0
  %212 = vmatprep.subr.mxu0 0.0
  %213 = vmatpush1.msra.mxu0 0.0
  %214 = vmatprep.subr.mxu0 0.0
  %215 = vmatpush1.msra.mxu0 0.0
  %216 = vmatprep.subr.mxu0 0.0
  %217 = vmatpush1.msra.mxu0 0.0
  %218 = vmatprep.subr.mxu0 0.0
  %219 = vmatpush1.msra.mxu0 0.0
  %220 = vmatprep.subr.mxu0 0.0
  %221 = vmatpush1.msra.mxu0 0.0
  %222 = vmatprep.subr.mxu0 0.0
  %223 = vmatpush1.msra.mxu0 0.0
  %224 = vmatprep.subr.mxu0 0.0
  %225 = vmatpush1.msra.mxu0 0.0
  %226 = vmatprep.subr.mxu0 0.0
  %227 = vmatpush1.msra.mxu0 0.0
  %228 = vmatprep.subr.mxu0 0.0
  %229 = vmatpush1.msra.mxu0 0.0
  %230 = vmatprep.mubr.f32.mxu0 0.0
  %231 = vmatmul.mubr.f32.gmra.mrb[0].mxu0 %v161
  %v232 = vpop.f32.mrb[0].mxu0
  %v233 = vadd.f32 %v151, %v232
  %v234 = vpop.f32.mrb[0].mxu0
  %235 = vmatprep.mubr.f32.mxu0 0.0
  %236 = vmatmul.mubr.f32.gmra.mrb[0].mxu0 %v164
  %v237 = vpop.f32.mrb[0].mxu0
  %v238 = vadd.f32 %v156, %v237
  %v239 = vpop.f32.mrb[0].mxu0
  %240 = vdwg.mxu0
  %v241 = vld [vmem:[%s1] sm:$0xff]
  %v242 = vld [vmem:[%s1 + $0x8] sm:$0xff]
  %v243 = vld [vmem:[%s5] sm:$0x3f]
  %vm244 = vcmask 261120
  %v245 = vsel %vm244, %v233, 0.0
  %246 = vadd.xlane.f32.xlu0 %v245
  %v247 = vpop.xlane.xlu0 %246
  %v248 = vsel %vm244, %v238, 0.0
  %249 = vadd.xlane.f32.xlu0 %v248
  %v250 = vpop.xlane.xlu0 %249
  %v251 = vrcp.pop 32.0
  %v252 = vmul.f32 %v247, %v251
  %v253 = vmul.f32 %v250, %v251
  %v254 = vsub.f32 %v233, %v252
  %v255 = vsub.f32 %v238, %v253
  %v256 = vmul.f32 %v254, %v254
  %v257 = vmul.f32 %v255, %v255
  %v258 = vsel %vm244, %v256, 0.0
  %259 = vadd.xlane.f32.xlu0 %v258
  %v260 = vpop.xlane.xlu0 %259
  %v261 = vsel %vm244, %v257, 0.0
  %262 = vadd.xlane.f32.xlu0 %v261
  %v263 = vpop.xlane.xlu0 %262
  %v264 = vmul.f32 %v260, %v251
  %v265 = vmul.f32 %v263, %v251
  %v266 = vadd.f32 %v264, 1e-05
  %v267 = vadd.f32 %v265, 1e-05
  %v268 = vrsqrt.pop %v266
  %v269 = vrsqrt.pop %v267
  %v270 = vmul.f32 %v254, %v268
  %v271 = vmul.f32 %v255, %v269
  %v272 = vlaneseq
  %v273 = vshrl.u32 %v272, 7
  %v274 = vsub.s32 0, %v273
  %v275 = vrot.slane %v243, %v274
  %v276 = vmul.f32 %v270, %v275
  %v277 = vmul.f32 %v271, %v275
  %v278 = vlaneseq
  %v279 = vshrl.u32 %v278, 7
  %v280 = vsub.s32 1, %v279
  %v281 = vrot.slane %v243, %v280
  %v282 = vadd.f32 %v276, %v281
  %v283 = vadd.f32 %v277, %v281
  %v284 = vld [vmem:[%s6] sm:$0xff]
  %v285 = vld [vmem:[%s6 + $0x8] sm:$0xff]
  %v286 = vld [vmem:[%s6 + $0x10] sm:$0xff]
  %v287 = vld [vmem:[%s6 + $0x18] sm:$0xff]
  %v288 = vld [vmem:[%s7] sm:$0x1]
  %v289 = vlaneseq
  %v290 = vshrl.u32 %v289, 7
  %v291 = vsub.s32 0, %v290
  %v292 = vrot.slane %v288, %v291
  %v294 = vsel %vm244, %v282, 0
  %v297 = vsel %vm244, %v283, 0
  %299 = vmatprep.subr.mxu0 0.0
  %300 = vmatpush1.msra.mxu0 %v284
  %301 = vmatprep.subr.mxu0 0.0
  %302 = vmatpush1.msra.mxu0 %v285
  %303 = vmatprep.subr.mxu0 0.0
  %304 = vmatpush1.msra.mxu0 %v286
  %305 = vmatprep.subr.mxu0 0.0
  %306 = vmatpush1.msra.mxu0 %v287
  %307 = vmatprep.subr.mxu0 0.0
  %308 = vmatpush1.msra.mxu0 0.0
  %309 = vmatprep.subr.mxu0 0.0
  %310 = vmatpush1.msra.mxu0 0.0
  %311 = vmatprep.subr.mxu0 0.0
  %312 = vmatpush1.msra.mxu0 0.0
  %313 = vmatprep.subr.mxu0 0.0
  %314 = vmatpush1.msra.mxu0 0.0
  %315 = vmatprep.subr.mxu0 0.0
  %316 = vmatpush1.msra.mxu0 0.0
  %317 = vmatprep.subr.mxu0 0.0
  %318 = vmatpush1.msra.mxu0 0.0
  %319 = vmatprep.subr.mxu0 0.0
  %320 = vmatpush1.msra.mxu0 0.0
  %321 = vmatprep.subr.mxu0 0.0
  %322 = vmatpush1.msra.mxu0 0.0
  %323 = vmatprep.subr.mxu0 0.0
  %324 = vmatpush1.msra.mxu0 0.0
  %325 = vmatprep.subr.mxu0 0.0
  %326 = vmatpush1.msra.mxu0 0.0
  %327 = vmatprep.subr.mxu0 0.0
  %328 = vmatpush1.msra.mxu0 0.0
  %329 = vmatprep.subr.mxu0 0.0
  %330 = vmatpush1.msra.mxu0 0.0
  %331 = vmatprep.subr.mxu0 0.0
  %332 = vmatpush1.msra.mxu0 0.0
  %333 = vmatprep.subr.mxu0 0.0
  %334 = vmatpush1.msra.mxu0 0.0
  %335 = vmatprep.subr.mxu0 0.0
  %336 = vmatpush1.msra.mxu0 0.0
  %337 = vmatprep.subr.mxu0 0.0
  %338 = vmatpush1.msra.mxu0 0.0
  %339 = vmatprep.subr.mxu0 0.0
  %340 = vmatpush1.msra.mxu0 0.0
  %341 = vmatprep.subr.mxu0 0.0
  %342 = vmatpush1.msra.mxu0 0.0
  %343 = vmatprep.subr.mxu0 0.0
  %344 = vmatpush1.msra.mxu0 0.0
  %345 = vmatprep.subr.mxu0 0.0
  %346 = vmatpush1.msra.mxu0 0.0
  %347 = vmatprep.subr.mxu0 0.0
  %348 = vmatpush1.msra.mxu0 0.0
  %349 = vmatprep.subr.mxu0 0.0
  %350 = vmatpush1.msra.mxu0 0.0
  %351 = vmatprep.subr.mxu0 0.0
  %352 = vmatpush1.msra.mxu0 0.0
  %353 = vmatprep.subr.mxu0 0.0
  %354 = vmatpush1.msra.mxu0 0.0
  %355 = vmatprep.subr.mxu0 0.0
  %356 = vmatpush1.msra.mxu0 0.0
  %357 = vmatprep.subr.mxu0 0.0
  %358 = vmatpush1.msra.mxu0 0.0
  %359 = vmatprep.subr.mxu0 0.0
  %360 = vmatpush1.msra.mxu0 0.0
  %361 = vmatprep.subr.mxu0 0.0
  %362 = vmatpush1.msra.mxu0 0.0
  %363 = vmatprep.mubr.f32.mxu0 0.0
  %364 = vmatmul.mubr.f32.gmra.mrb[0].mxu0 %v294
  %v365 = vpop.f32.mrb[0].mxu0
  %v366 = vadd.f32 %v292, %v365
  %v367 = vpop.f32.mrb[0].mxu0
  %368 = vmatprep.mubr.f32.mxu0 0.0
  %369 = vmatmul.mubr.f32.gmra.mrb[0].mxu0 %v297
  %v370 = vpop.f32.mrb[0].mxu0
  %v371 = vadd.f32 %v292, %v370
  %v372 = vpop.f32.mrb[0].mxu0
  %373 = vdwg.mxu0
  %v374 = vld [vmem:[%s8] sm:$0xff]
  %v375 = vld [vmem:[%s8 + $0x8] sm:$0xff]
  %v376 = vld [vmem:[%s8 + $0x10] sm:$0xff]
  %v377 = vld [vmem:[%s8 + $0x18] sm:$0xff]
  %380 = vrot.lane.b32.xlu0 %v366, 96
  %v381 = vpop.permute.xlu0 %380
  %382 = vrot.lane.b32.xlu0 %v371, 96
  %v383 = vpop.permute.xlu0 %382
  %vm384 = vcmask 130048
  %v385 = vsel %vm384, %v366, 0
  %v387 = vsel %vm384, %v371, 0
  %v389 = vsel %vm384, %v381, 0
  %v391 = vsel %vm384, %v383, 0
  %393 = vmatprep.subr.mxu0 0.0
  %394 = vmatpush1.xpose.msra.mxu0 %v389
  %395 = vmatprep.subr.mxu0 0.0
  %396 = vmatpush1.xpose.msra.mxu0 %v391
  %397 = vmatprep.subr.mxu0 0.0
  %398 = vmatpush1.xpose.msra.mxu0 0.0
  %399 = vmatprep.subr.mxu0 0.0
  %400 = vmatpush1.xpose.msra.mxu0 0.0
  %401 = vmatprep.subr.mxu0 0.0
  %402 = vmatpush1.xpose.msra.mxu0 0.0
  %403 = vmatprep.subr.mxu0 0.0
  %404 = vmatpush1.xpose.msra.mxu0 0.0
  %405 = vmatprep.subr.mxu0 0.0
  %406 = vmatpush1.xpose.msra.mxu0 0.0
  %407 = vmatprep.subr.mxu0 0.0
  %408 = vmatpush1.xpose.msra.mxu0 0.0
  %409 = vmatprep.subr.mxu0 0.0
  %410 = vmatpush1.xpose.msra.mxu0 0.0
  %411 = vmatprep.subr.mxu0 0.0
  %412 = vmatpush1.xpose.msra.mxu0 0.0
  %413 = vmatprep.subr.mxu0 0.0
  %414 = vmatpush1.xpose.msra.mxu0 0.0
  %415 = vmatprep.subr.mxu0 0.0
  %416 = vmatpush1.xpose.msra.mxu0 0.0
  %417 = vmatprep.subr.mxu0 0.0
  %418 = vmatpush1.xpose.msra.mxu0 0.0
  %419 = vmatprep.subr.mxu0 0.0
  %420 = vmatpush1.xpose.msra.mxu0 0.0
  %421 = vmatprep.subr.mxu0 0.0
  %422 = vmatpush1.xpose.msra.mxu0 0.0
  %423 = vmatprep.subr.mxu0 0.0
  %424 = vmatpush1.xpose.msra.mxu0 0.0
  %425 = vmatprep.subr.mxu0 0.0
  %426 = vmatpush1.xpose.msra.mxu0 0.0
  %427 = vmatprep.subr.mxu0 0.0
  %428 = vmatpush1.xpose.msra.mxu0 0.0
  %429 = vmatprep.subr.mxu0 0.0
  %430 = vmatpush1.xpose.msra.mxu0 0.0
  %431 = vmatprep.subr.mxu0 0.0
  %432 = vmatpush1.xpose.msra.mxu0 0.0
  %433 = vmatprep.subr.mxu0 0.0
  %434 = vmatpush1.xpose.msra.mxu0 0.0
  %435 = vmatprep.subr.mxu0 0.0
  %436 = vmatpush1.xpose.msra.mxu0 0.0
  %437 = vmatprep.subr.mxu0 0.0
  %438 = vmatpush1.xpose.msra.mxu0 0.0
  %439 = vmatprep.subr.mxu0 0.0
  %440 = vmatpush1.xpose.msra.mxu0 0.0
  %441 = vmatprep.subr.mxu0 0.0
  %442 = vmatpush1.xpose.msra.mxu0 0.0
  %443 = vmatprep.subr.mxu0 0.0
  %444 = vmatpush1.xpose.msra.mxu0 0.0
  %445 = vmatprep.subr.mxu0 0.0
  %446 = vmatpush1.xpose.msra.mxu0 0.0
  %447 = vmatprep.subr.mxu0 0.0
  %448 = vmatpush1.xpose.msra.mxu0 0.0
  %449 = vmatprep.subr.mxu0 0.0
  %450 = vmatpush1.xpose.msra.mxu0 0.0
  %451 = vmatprep.subr.mxu0 0.0
  %452 = vmatpush1.xpose.msra.mxu0 0.0
  %453 = vmatprep.subr.mxu0 0.0
  %454 = vmatpush1.xpose.msra.mxu0 0.0
  %455 = vmatprep.subr.mxu0 0.0
  %456 = vmatpush1.xpose.msra.mxu0 0.0
  %457 = vmatprep.mubr.f32.mxu0 0.0
  %458 = vmatmul.mubr.f32.gmra.mrb[0].mxu0 %v385
  %v459 = vpop.f32.mrb[0].mxu0
  %v460 = vadd.f32 0.0, %v459
  %v461 = vpop.f32.mrb[0].mxu0
  %462 = vmatprep.mubr.f32.mxu0 0.0
  %463 = vmatmul.mubr.f32.gmra.mrb[0].mxu0 %v387
  %v464 = vpop.f32.mrb[0].mxu0
  %v465 = vadd.f32 0.0, %v464
  %v466 = vpop.f32.mrb[0].mxu0
  %467 = vdwg.mxu0
  %v468 = vmul.f32 %v460, 0.25
  %v469 = vmul.f32 %v465, 0.25
  %v470 = vadd.f32 %v468, %v241
  %v471 = vadd.f32 %v469, %v242
  %v472 = vsel %vm384, %v470, -inf
  %473 = vmax.xlane.f32.xlu0 %v472
  %v474 = vpop.xlane.xlu0 %473
  %v475 = vsel %vm384, %v471, -inf
  %476 = vmax.xlane.f32.xlu0 %v475
  %v477 = vpop.xlane.xlu0 %476
  %v478 = vsub.f32 %v470, %v474
  %v479 = vsub.f32 %v471, %v477
  %v480 = vmul.f32 %v478, 1.442695
  %v481 = vpow.pop %v480
  %v482 = vmul.f32 %v479, 1.442695
  %v483 = vpow.pop %v482
  %v484 = vsel %vm384, %v481, 0.0
  %485 = vadd.xlane.f32.xlu0 %v484
  %v486 = vpop.xlane.xlu0 %485
  %v487 = vsel %vm384, %v483, 0.0
  %488 = vadd.xlane.f32.xlu0 %v487
  %v489 = vpop.xlane.xlu0 %488
  %v490 = vrcp.pop %v486
  %v491 = vrcp.pop %v489
  %v492 = vmul.f32 %v481, %v490
  %v493 = vmul.f32 %v483, %v491
  %494 = vrot.lane.b32.xlu0 %v366, 64
  %v495 = vpop.permute.xlu0 %494
  %496 = vrot.lane.b32.xlu0 %v371, 64
  %v497 = vpop.permute.xlu0 %496
  %v501 = vsel %vm384, %v492, 0
  %v504 = vsel %vm384, %v493, 0
  %506 = vmatprep.subr.mxu0 0.0
  %507 = vmatpush1.msra.mxu0 %v495
  %508 = vmatprep.subr.mxu0 0.0
  %509 = vmatpush1.msra.mxu0 %v497
  %510 = vmatprep.subr.mxu0 0.0
  %511 = vmatpush1.msra.mxu0 0.0
  %512 = vmatprep.subr.mxu0 0.0
  %513 = vmatpush1.msra.mxu0 0.0
  %514 = vmatprep.subr.mxu0 0.0
  %515 = vmatpush1.msra.mxu0 0.0
  %516 = vmatprep.subr.mxu0 0.0
  %517 = vmatpush1.msra.mxu0 0.0
  %518 = vmatprep.subr.mxu0 0.0
  %519 = vmatpush1.msra.mxu0 0.0
  %520 = vmatprep.subr.mxu0 0.0
  %521 = vmatpush1.msra.mxu0 0.0
  %522 = vmatprep.subr.mxu0 0.0
  %523 = vmatpush1.msra.mxu0 0.0
  %524 = vmatprep.subr.mxu0 0.0
  %525 = vmatpush1.msra.mxu0 0.0
  %526 = vmatprep.subr.mxu0 0.0
  %527 = vmatpush1.msra.mxu0 0.0
  %528 = vmatprep.subr.mxu0 0.0
  %529 = vmatpush1.msra.mxu0 0.0
  %530 = vmatprep.subr.mxu0 0.0
  %531 = vmatpush1.msra.mxu0 0.0
  %532 = vmatprep.subr.mxu0 0.0
  %533 = vmatpush1.msra.mxu0 0.0
  %534 = vmatprep.subr.mxu0 0.0
  %535 = vmatpush1.msra.mxu0 0.0
  %536 = vmatprep.subr.mxu0 0.0
  %537 = vmatpush1.msra.mxu0 0.0
  %538 = vmatprep.subr.mxu0 0.0
  %539 = vmatpush1.msra.mxu0 0.0
  %540 = vmatprep.subr.mxu0 0.0
  %541 = vmatpush1.msra.mxu0 0.0
  %542 = vmatprep.subr.mxu0 0.0
  %543 = vmatpush1.msra.mxu0 0.0
  %544 = vmatprep.subr.mxu0 0.0
  %545 = vmatpush1.msra.mxu0 0.0
  %546 = vmatprep.subr.mxu0 0.0
  %547 = vmatpush1.msra.mxu0 0.0
  %548 = vmatprep.subr.mxu0 0.0
  %549 = vmatpush1.msra.mxu0 0.0
  %550 = vmatprep.subr.mxu0 0.0
  %551 = vmatpush1.msra.mxu0 0.0
  %552 = vmatprep.subr.mxu0 0.0
  %553 = vmatpush1.msra.mxu0 0.0
  %554 = vmatprep.subr.mxu0 0.0
  %555 = vmatpush1.msra.mxu0 0.0
  %556 = vmatprep.subr.mxu0 0.0
  %557 = vmatpush1.msra.mxu0 0.0
  %558 = vmatprep.subr.mxu0 0.0
  %559 = vmatpush1.msra.mxu0 0.0
  %560 = vmatprep.subr.mxu0 0.0
  %561 = vmatpush1.msra.mxu0 0.0
  %562 = vmatprep.subr.mxu0 0.0
  %563 = vmatpush1.msra.mxu0 0.0
  %564 = vmatprep.subr.mxu0 0.0
  %565 = vmatpush1.msra.mxu0 0.0
  %566 = vmatprep.subr.mxu0 0.0
  %567 = vmatpush1.msra.mxu0 0.0
  %568 = vmatprep.subr.mxu0 0.0
  %569 = vmatpush1.msra.mxu0 0.0
  %570 = vmatprep.mubr.f32.mxu0 0.0
  %571 = vmatmul.mubr.f32.gmra.mrb[0].mxu0 %v501
  %v572 = vpop.f32.mrb[0].mxu0
  %v573 = vadd.f32 0.0, %v572
  %v574 = vpop.f32.mrb[0].mxu0
  %575 = vmatprep.mubr.f32.mxu0 0.0
  %576 = vmatmul.mubr.f32.gmra.mrb[0].mxu0 %v504
  %v577 = vpop.f32.mrb[0].mxu0
  %v578 = vadd.f32 0.0, %v577
  %v579 = vpop.f32.mrb[0].mxu0
  %580 = vdwg.mxu0
  %581 = vrot.lane.b32.xlu0 %v366, 112
  %v582 = vpop.permute.xlu0 %581
  %583 = vrot.lane.b32.xlu0 %v371, 112
  %v584 = vpop.permute.xlu0 %583
  %585 = vrot.lane.b32.xlu0 %v366, 80
  %v586 = vpop.permute.xlu0 %585
  %587 = vrot.lane.b32.xlu0 %v371, 80
  %v588 = vpop.permute.xlu0 %587
  %v589 = vsel %vm384, %v582, 0
  %v591 = vsel %vm384, %v584, 0
  %v593 = vsel %vm384, %v586, 0
  %v595 = vsel %vm384, %v588, 0
  %597 = vmatprep.subr.mxu0 0.0
  %598 = vmatpush1.xpose.msra.mxu0 %v593
  %599 = vmatprep.subr.mxu0 0.0
  %600 = vmatpush1.xpose.msra.mxu0 %v595
  %601 = vmatprep.subr.mxu0 0.0
  %602 = vmatpush1.xpose.msra.mxu0 0.0
  %603 = vmatprep.subr.mxu0 0.0
  %604 = vmatpush1.xpose.msra.mxu0 0.0
  %605 = vmatprep.subr.mxu0 0.0
  %606 = vmatpush1.xpose.msra.mxu0 0.0
  %607 = vmatprep.subr.mxu0 0.0
  %608 = vmatpush1.xpose.msra.mxu0 0.0
  %609 = vmatprep.subr.mxu0 0.0
  %610 = vmatpush1.xpose.msra.mxu0 0.0
  %611 = vmatprep.subr.mxu0 0.0
  %612 = vmatpush1.xpose.msra.mxu0 0.0
  %613 = vmatprep.subr.mxu0 0.0
  %614 = vmatpush1.xpose.msra.mxu0 0.0
  %615 = vmatprep.subr.mxu0 0.0
  %616 = vmatpush1.xpose.msra.mxu0 0.0
  %617 = vmatprep.subr.mxu0 0.0
  %618 = vmatpush1.xpose.msra.mxu0 0.0
  %619 = vmatprep.subr.mxu0 0.0
  %620 = vmatpush1.xpose.msra.mxu0 0.0
  %621 = vmatprep.subr.mxu0 0.0
  %622 = vmatpush1.xpose.msra.mxu0 0.0
  %623 = vmatprep.subr.mxu0 0.0
  %624 = vmatpush1.xpose.msra.mxu0 0.0
  %625 = vmatprep.subr.mxu0 0.0
  %626 = vmatpush1.xpose.msra.mxu0 0.0
  %627 = vmatprep.subr.mxu0 0.0
  %628 = vmatpush1.xpose.msra.mxu0 0.0
  %629 = vmatprep.subr.mxu0 0.0
  %630 = vmatpush1.xpose.msra.mxu0 0.0
  %631 = vmatprep.subr.mxu0 0.0
  %632 = vmatpush1.xpose.msra.mxu0 0.0
  %633 = vmatprep.subr.mxu0 0.0
  %634 = vmatpush1.xpose.msra.mxu0 0.0
  %635 = vmatprep.subr.mxu0 0.0
  %636 = vmatpush1.xpose.msra.mxu0 0.0
  %637 = vmatprep.subr.mxu0 0.0
  %638 = vmatpush1.xpose.msra.mxu0 0.0
  %639 = vmatprep.subr.mxu0 0.0
  %640 = vmatpush1.xpose.msra.mxu0 0.0
  %641 = vmatprep.subr.mxu0 0.0
  %642 = vmatpush1.xpose.msra.mxu0 0.0
  %643 = vmatprep.subr.mxu0 0.0
  %644 = vmatpush1.xpose.msra.mxu0 0.0
  %645 = vmatprep.subr.mxu0 0.0
  %646 = vmatpush1.xpose.msra.mxu0 0.0
  %647 = vmatprep.subr.mxu0 0.0
  %648 = vmatpush1.xpose.msra.mxu0 0.0
  %649 = vmatprep.subr.mxu0 0.0
  %650 = vmatpush1.xpose.msra.mxu0 0.0
  %651 = vmatprep.subr.mxu0 0.0
  %652 = vmatpush1.xpose.msra.mxu0 0.0
  %653 = vmatprep.subr.mxu0 0.0
  %654 = vmatpush1.xpose.msra.mxu0 0.0
  %655 = vmatprep.subr.mxu0 0.0
  %656 = vmatpush1.xpose.msra.mxu0 0.0
  %657 = vmatprep.subr.mxu0 0.0
  %658 = vmatpush1.xpose.msra.mxu0 0.0
  %659 = vmatprep.subr.mxu0 0.0
  %660 = vmatpush1.xpose.msra.mxu0 0.0
  %661 = vmatprep.mubr.f32.mxu0 0.0
  %662 = vmatmul.mubr.f32.gmra.mrb[0].mxu0 %v589
  %v663 = vpop.f32.mrb[0].mxu0
  %v664 = vadd.f32 0.0, %v663
  %v665 = vpop.f32.mrb[0].mxu0
  %666 = vmatprep.mubr.f32.mxu0 0.0
  %667 = vmatmul.mubr.f32.gmra.mrb[0].mxu0 %v591
  %v668 = vpop.f32.mrb[0].mxu0
  %v669 = vadd.f32 0.0, %v668
  %v670 = vpop.f32.mrb[0].mxu0
  %671 = vdwg.mxu0
  %v672 = vmul.f32 %v664, 0.25
  %v673 = vmul.f32 %v669, 0.25
  %v674 = vadd.f32 %v672, %v241
  %v675 = vadd.f32 %v673, %v242
  %v676 = vsel %vm384, %v674, -inf
  %677 = vmax.xlane.f32.xlu0 %v676
  %v678 = vpop.xlane.xlu0 %677
  %v679 = vsel %vm384, %v675, -inf
  %680 = vmax.xlane.f32.xlu0 %v679
  %v681 = vpop.xlane.xlu0 %680
  %v682 = vsub.f32 %v674, %v678
  %v683 = vsub.f32 %v675, %v681
  %v684 = vmul.f32 %v682, 1.442695
  %v685 = vpow.pop %v684
  %v686 = vmul.f32 %v683, 1.442695
  %v687 = vpow.pop %v686
  %v688 = vsel %vm384, %v685, 0.0
  %689 = vadd.xlane.f32.xlu0 %v688
  %v690 = vpop.xlane.xlu0 %689
  %v691 = vsel %vm384, %v687, 0.0
  %692 = vadd.xlane.f32.xlu0 %v691
  %v693 = vpop.xlane.xlu0 %692
  %v694 = vrcp.pop %v690
  %v695 = vrcp.pop %v693
  %v696 = vmul.f32 %v685, %v694
  %v697 = vmul.f32 %v687, %v695
  %698 = vrot.lane.b32.xlu0 %v366, 48
  %v699 = vpop.permute.xlu0 %698
  %700 = vrot.lane.b32.xlu0 %v371, 48
  %v701 = vpop.permute.xlu0 %700
  %v705 = vsel %vm384, %v696, 0
  %v708 = vsel %vm384, %v697, 0
  %710 = vmatprep.subr.mxu0 0.0
  %711 = vmatpush1.msra.mxu0 %v699
  %712 = vmatprep.subr.mxu0 0.0
  %713 = vmatpush1.msra.mxu0 %v701
  %714 = vmatprep.subr.mxu0 0.0
  %715 = vmatpush1.msra.mxu0 0.0
  %716 = vmatprep.subr.mxu0 0.0
  %717 = vmatpush1.msra.mxu0 0.0
  %718 = vmatprep.subr.mxu0 0.0
  %719 = vmatpush1.msra.mxu0 0.0
  %720 = vmatprep.subr.mxu0 0.0
  %721 = vmatpush1.msra.mxu0 0.0
  %722 = vmatprep.subr.mxu0 0.0
  %723 = vmatpush1.msra.mxu0 0.0
  %724 = vmatprep.subr.mxu0 0.0
  %725 = vmatpush1.msra.mxu0 0.0
  %726 = vmatprep.subr.mxu0 0.0
  %727 = vmatpush1.msra.mxu0 0.0
  %728 = vmatprep.subr.mxu0 0.0
  %729 = vmatpush1.msra.mxu0 0.0
  %730 = vmatprep.subr.mxu0 0.0
  %731 = vmatpush1.msra.mxu0 0.0
  %732 = vmatprep.subr.mxu0 0.0
  %733 = vmatpush1.msra.mxu0 0.0
  %734 = vmatprep.subr.mxu0 0.0
  %735 = vmatpush1.msra.mxu0 0.0
  %736 = vmatprep.subr.mxu0 0.0
  %737 = vmatpush1.msra.mxu0 0.0
  %738 = vmatprep.subr.mxu0 0.0
  %739 = vmatpush1.msra.mxu0 0.0
  %740 = vmatprep.subr.mxu0 0.0
  %741 = vmatpush1.msra.mxu0 0.0
  %742 = vmatprep.subr.mxu0 0.0
  %743 = vmatpush1.msra.mxu0 0.0
  %744 = vmatprep.subr.mxu0 0.0
  %745 = vmatpush1.msra.mxu0 0.0
  %746 = vmatprep.subr.mxu0 0.0
  %747 = vmatpush1.msra.mxu0 0.0
  %748 = vmatprep.subr.mxu0 0.0
  %749 = vmatpush1.msra.mxu0 0.0
  %750 = vmatprep.subr.mxu0 0.0
  %751 = vmatpush1.msra.mxu0 0.0
  %752 = vmatprep.subr.mxu0 0.0
  %753 = vmatpush1.msra.mxu0 0.0
  %754 = vmatprep.subr.mxu0 0.0
  %755 = vmatpush1.msra.mxu0 0.0
  %756 = vmatprep.subr.mxu0 0.0
  %757 = vmatpush1.msra.mxu0 0.0
  %758 = vmatprep.subr.mxu0 0.0
  %759 = vmatpush1.msra.mxu0 0.0
  %760 = vmatprep.subr.mxu0 0.0
  %761 = vmatpush1.msra.mxu0 0.0
  %762 = vmatprep.subr.mxu0 0.0
  %763 = vmatpush1.msra.mxu0 0.0
  %764 = vmatprep.subr.mxu0 0.0
  %765 = vmatpush1.msra.mxu0 0.0
  %766 = vmatprep.subr.mxu0 0.0
  %767 = vmatpush1.msra.mxu0 0.0
  %768 = vmatprep.subr.mxu0 0.0
  %769 = vmatpush1.msra.mxu0 0.0
  %770 = vmatprep.subr.mxu0 0.0
  %771 = vmatpush1.msra.mxu0 0.0
  %772 = vmatprep.subr.mxu0 0.0
  %773 = vmatpush1.msra.mxu0 0.0
  %774 = vmatprep.mubr.f32.mxu0 0.0
  %775 = vmatmul.mubr.f32.gmra.mrb[0].mxu0 %v705
  %v776 = vpop.f32.mrb[0].mxu0
  %v777 = vadd.f32 0.0, %v776
  %v778 = vpop.f32.mrb[0].mxu0
  %779 = vmatprep.mubr.f32.mxu0 0.0
  %780 = vmatmul.mubr.f32.gmra.mrb[0].mxu0 %v708
  %v781 = vpop.f32.mrb[0].mxu0
  %v782 = vadd.f32 0.0, %v781
  %v783 = vpop.f32.mrb[0].mxu0
  %784 = vdwg.mxu0
  %v786 = vsel %vm384, %v777, 0
  %v789 = vsel %vm384, %v782, 0
  %791 = vmatprep.subr.mxu0 0.0
  %792 = vmatpush1.msra.mxu0 %v376
  %793 = vmatprep.subr.mxu0 0.0
  %794 = vmatpush1.msra.mxu0 %v377
  %795 = vmatprep.subr.mxu0 0.0
  %796 = vmatpush1.msra.mxu0 0.0
  %797 = vmatprep.subr.mxu0 0.0
  %798 = vmatpush1.msra.mxu0 0.0
  %799 = vmatprep.subr.mxu0 0.0
  %800 = vmatpush1.msra.mxu0 0.0
  %801 = vmatprep.subr.mxu0 0.0
  %802 = vmatpush1.msra.mxu0 0.0
  %803 = vmatprep.subr.mxu0 0.0
  %804 = vmatpush1.msra.mxu0 0.0
  %805 = vmatprep.subr.mxu0 0.0
  %806 = vmatpush1.msra.mxu0 0.0
  %807 = vmatprep.subr.mxu0 0.0
  %808 = vmatpush1.msra.mxu0 0.0
  %809 = vmatprep.subr.mxu0 0.0
  %810 = vmatpush1.msra.mxu0 0.0
  %811 = vmatprep.subr.mxu0 0.0
  %812 = vmatpush1.msra.mxu0 0.0
  %813 = vmatprep.subr.mxu0 0.0
  %814 = vmatpush1.msra.mxu0 0.0
  %815 = vmatprep.subr.mxu0 0.0
  %816 = vmatpush1.msra.mxu0 0.0
  %817 = vmatprep.subr.mxu0 0.0
  %818 = vmatpush1.msra.mxu0 0.0
  %819 = vmatprep.subr.mxu0 0.0
  %820 = vmatpush1.msra.mxu0 0.0
  %821 = vmatprep.subr.mxu0 0.0
  %822 = vmatpush1.msra.mxu0 0.0
  %823 = vmatprep.subr.mxu0 0.0
  %824 = vmatpush1.msra.mxu0 0.0
  %825 = vmatprep.subr.mxu0 0.0
  %826 = vmatpush1.msra.mxu0 0.0
  %827 = vmatprep.subr.mxu0 0.0
  %828 = vmatpush1.msra.mxu0 0.0
  %829 = vmatprep.subr.mxu0 0.0
  %830 = vmatpush1.msra.mxu0 0.0
  %831 = vmatprep.subr.mxu0 0.0
  %832 = vmatpush1.msra.mxu0 0.0
  %833 = vmatprep.subr.mxu0 0.0
  %834 = vmatpush1.msra.mxu0 0.0
  %835 = vmatprep.subr.mxu0 0.0
  %836 = vmatpush1.msra.mxu0 0.0
  %837 = vmatprep.subr.mxu0 0.0
  %838 = vmatpush1.msra.mxu0 0.0
  %839 = vmatprep.subr.mxu0 0.0
  %840 = vmatpush1.msra.mxu0 0.0
  %841 = vmatprep.subr.mxu0 0.0
  %842 = vmatpush1.msra.mxu0 0.0
  %843 = vmatprep.subr.mxu0 0.0
  %844 = vmatpush1.msra.mxu0 0.0
  %845 = vmatprep.subr.mxu0 0.0
  %846 = vmatpush1.msra.mxu0 0.0
  %847 = vmatprep.subr.mxu0 0.0
  %848 = vmatpush1.msra.mxu0 0.0
  %849 = vmatprep.subr.mxu0 0.0
  %850 = vmatpush1.msra.mxu0 0.0
  %851 = vmatprep.subr.mxu0 0.0
  %852 = vmatpush1.msra.mxu0 0.0
  %853 = vmatprep.subr.mxu0 0.0
  %854 = vmatpush1.msra.mxu0 0.0
  %855 = vmatprep.mubr.f32.mxu0 0.0
  %856 = vmatmul.mubr.f32.gmra.mrb[0].mxu0 %v786
  %v857 = vpop.f32.mrb[0].mxu0
  %v858 = vadd.f32 0.0, %v857
  %v859 = vpop.f32.mrb[0].mxu0
  %860 = vmatprep.mubr.f32.mxu0 0.0
  %861 = vmatmul.mubr.f32.gmra.mrb[0].mxu0 %v789
  %v862 = vpop.f32.mrb[0].mxu0
  %v863 = vadd.f32 0.0, %v862
  %v864 = vpop.f32.mrb[0].mxu0
  %865 = vdwg.mxu0
  %v867 = vsel %vm384, %v573, 0
  %v870 = vsel %vm384, %v578, 0
  %872 = vmatprep.subr.mxu0 0.0
  %873 = vmatpush1.msra.mxu0 %v374
  %874 = vmatprep.subr.mxu0 0.0
  %875 = vmatpush1.msra.mxu0 %v375
  %876 = vmatprep.subr.mxu0 0.0
  %877 = vmatpush1.msra.mxu0 0.0
  %878 = vmatprep.subr.mxu0 0.0
  %879 = vmatpush1.msra.mxu0 0.0
  %880 = vmatprep.subr.mxu0 0.0
  %881 = vmatpush1.msra.mxu0 0.0
  %882 = vmatprep.subr.mxu0 0.0
  %883 = vmatpush1.msra.mxu0 0.0
  %884 = vmatprep.subr.mxu0 0.0
  %885 = vmatpush1.msra.mxu0 0.0
  %886 = vmatprep.subr.mxu0 0.0
  %887 = vmatpush1.msra.mxu0 0.0
  %888 = vmatprep.subr.mxu0 0.0
  %889 = vmatpush1.msra.mxu0 0.0
  %890 = vmatprep.subr.mxu0 0.0
  %891 = vmatpush1.msra.mxu0 0.0
  %892 = vmatprep.subr.mxu0 0.0
  %893 = vmatpush1.msra.mxu0 0.0
  %894 = vmatprep.subr.mxu0 0.0
  %895 = vmatpush1.msra.mxu0 0.0
  %896 = vmatprep.subr.mxu0 0.0
  %897 = vmatpush1.msra.mxu0 0.0
  %898 = vmatprep.subr.mxu0 0.0
  %899 = vmatpush1.msra.mxu0 0.0
  %900 = vmatprep.subr.mxu0 0.0
  %901 = vmatpush1.msra.mxu0 0.0
  %902 = vmatprep.subr.mxu0 0.0
  %903 = vmatpush1.msra.mxu0 0.0
  %904 = vmatprep.subr.mxu0 0.0
  %905 = vmatpush1.msra.mxu0 0.0
  %906 = vmatprep.subr.mxu0 0.0
  %907 = vmatpush1.msra.mxu0 0.0
  %908 = vmatprep.subr.mxu0 0.0
  %909 = vmatpush1.msra.mxu0 0.0
  %910 = vmatprep.subr.mxu0 0.0
  %911 = vmatpush1.msra.mxu0 0.0
  %912 = vmatprep.subr.mxu0 0.0
  %913 = vmatpush1.msra.mxu0 0.0
  %914 = vmatprep.subr.mxu0 0.0
  %915 = vmatpush1.msra.mxu0 0.0
  %916 = vmatprep.subr.mxu0 0.0
  %917 = vmatpush1.msra.mxu0 0.0
  %918 = vmatprep.subr.mxu0 0.0
  %919 = vmatpush1.msra.mxu0 0.0
  %920 = vmatprep.subr.mxu0 0.0
  %921 = vmatpush1.msra.mxu0 0.0
  %922 = vmatprep.subr.mxu0 0.0
  %923 = vmatpush1.msra.mxu0 0.0
  %924 = vmatprep.subr.mxu0 0.0
  %925 = vmatpush1.msra.mxu0 0.0
  %926 = vmatprep.subr.mxu0 0.0
  %927 = vmatpush1.msra.mxu0 0.0
  %928 = vmatprep.subr.mxu0 0.0
  %929 = vmatpush1.msra.mxu0 0.0
  %930 = vmatprep.subr.mxu0 0.0
  %931 = vmatpush1.msra.mxu0 0.0
  %932 = vmatprep.subr.mxu0 0.0
  %933 = vmatpush1.msra.mxu0 0.0
  %934 = vmatprep.subr.mxu0 0.0
  %935 = vmatpush1.msra.mxu0 0.0
  %936 = vmatprep.mubr.f32.mxu0 0.0
  %937 = vmatmul.mubr.f32.gmra.mrb[0].mxu0 %v867
  %v938 = vpop.f32.mrb[0].mxu0
  %v939 = vadd.f32 %v858, %v938
  %v940 = vpop.f32.mrb[0].mxu0
  %941 = vmatprep.mubr.f32.mxu0 0.0
  %942 = vmatmul.mubr.f32.gmra.mrb[0].mxu0 %v870
  %v943 = vpop.f32.mrb[0].mxu0
  %v944 = vadd.f32 %v863, %v943
  %v945 = vpop.f32.mrb[0].mxu0
  %946 = vdwg.mxu0
  %v947 = vadd.f32 %v233, %v939
  %v948 = vadd.f32 %v238, %v944
  %v949 = vlaneseq
  %v950 = vshrl.u32 %v949, 7
  %v951 = vsub.s32 4, %v950
  %v952 = vrot.slane %v243, %v951
  %v953 = vadd.f32 %v947, %v952
  %v954 = vadd.f32 %v948, %v952
  %v955 = vsel %vm244, %v953, 0.0
  %956 = vadd.xlane.f32.xlu0 %v955
  %v957 = vpop.xlane.xlu0 %956
  %v958 = vsel %vm244, %v954, 0.0
  %959 = vadd.xlane.f32.xlu0 %v958
  %v960 = vpop.xlane.xlu0 %959
  %v961 = vmul.f32 %v957, %v251
  %v962 = vmul.f32 %v960, %v251
  %v963 = vsub.f32 %v953, %v961
  %v964 = vsub.f32 %v954, %v962
  %v965 = vmul.f32 %v963, %v963
  %v966 = vmul.f32 %v964, %v964
  %v967 = vsel %vm244, %v965, 0.0
  %968 = vadd.xlane.f32.xlu0 %v967
  %v969 = vpop.xlane.xlu0 %968
  %v970 = vsel %vm244, %v966, 0.0
  %971 = vadd.xlane.f32.xlu0 %v970
  %v972 = vpop.xlane.xlu0 %971
  %v973 = vmul.f32 %v969, %v251
  %v974 = vmul.f32 %v972, %v251
  %v975 = vadd.f32 %v973, 1e-05
  %v976 = vadd.f32 %v974, 1e-05
  %v977 = vrsqrt.pop %v975
  %v978 = vrsqrt.pop %v976
  %v979 = vmul.f32 %v963, %v977
  %v980 = vmul.f32 %v964, %v978
  %v981 = vlaneseq
  %v982 = vshrl.u32 %v981, 7
  %v983 = vsub.s32 2, %v982
  %v984 = vrot.slane %v243, %v983
  %v985 = vmul.f32 %v979, %v984
  %v986 = vmul.f32 %v980, %v984
  %v987 = vlaneseq
  %v988 = vshrl.u32 %v987, 7
  %v989 = vsub.s32 3, %v988
  %v990 = vrot.slane %v243, %v989
  %v991 = vadd.f32 %v985, %v990
  %v992 = vadd.f32 %v986, %v990
  %v993 = vld [vmem:[%s9] sm:$0xff]
  %v994 = vld [vmem:[%s9 + $0x8] sm:$0xff]
  %v995 = vld [vmem:[%s9 + $0x10] sm:$0xff]
  %v996 = vld [vmem:[%s9 + $0x18] sm:$0xff]
  %v997 = vld [vmem:[%s10] sm:$0x1]
  %v998 = vlaneseq
  %v999 = vshrl.u32 %v998, 7
  %v1000 = vsub.s32 0, %v999
  %v1001 = vrot.slane %v997, %v1000
  %v1003 = vsel %vm244, %v991, 0
  %v1006 = vsel %vm244, %v992, 0
  %1008 = vmatprep.subr.mxu0 0.0
  %1009 = vmatpush1.msra.mxu0 %v993
  %1010 = vmatprep.subr.mxu0 0.0
  %1011 = vmatpush1.msra.mxu0 %v994
  %1012 = vmatprep.subr.mxu0 0.0
  %1013 = vmatpush1.msra.mxu0 %v995
  %1014 = vmatprep.subr.mxu0 0.0
  %1015 = vmatpush1.msra.mxu0 %v996
  %1016 = vmatprep.subr.mxu0 0.0
  %1017 = vmatpush1.msra.mxu0 0.0
  %1018 = vmatprep.subr.mxu0 0.0
  %1019 = vmatpush1.msra.mxu0 0.0
  %1020 = vmatprep.subr.mxu0 0.0
  %1021 = vmatpush1.msra.mxu0 0.0
  %1022 = vmatprep.subr.mxu0 0.0
  %1023 = vmatpush1.msra.mxu0 0.0
  %1024 = vmatprep.subr.mxu0 0.0
  %1025 = vmatpush1.msra.mxu0 0.0
  %1026 = vmatprep.subr.mxu0 0.0
  %1027 = vmatpush1.msra.mxu0 0.0
  %1028 = vmatprep.subr.mxu0 0.0
  %1029 = vmatpush1.msra.mxu0 0.0
  %1030 = vmatprep.subr.mxu0 0.0
  %1031 = vmatpush1.msra.mxu0 0.0
  %1032 = vmatprep.subr.mxu0 0.0
  %1033 = vmatpush1.msra.mxu0 0.0
  %1034 = vmatprep.subr.mxu0 0.0
  %1035 = vmatpush1.msra.mxu0 0.0
  %1036 = vmatprep.subr.mxu0 0.0
  %1037 = vmatpush1.msra.mxu0 0.0
  %1038 = vmatprep.subr.mxu0 0.0
  %1039 = vmatpush1.msra.mxu0 0.0
  %1040 = vmatprep.subr.mxu0 0.0
  %1041 = vmatpush1.msra.mxu0 0.0
  %1042 = vmatprep.subr.mxu0 0.0
  %1043 = vmatpush1.msra.mxu0 0.0
  %1044 = vmatprep.subr.mxu0 0.0
  %1045 = vmatpush1.msra.mxu0 0.0
  %1046 = vmatprep.subr.mxu0 0.0
  %1047 = vmatpush1.msra.mxu0 0.0
  %1048 = vmatprep.subr.mxu0 0.0
  %1049 = vmatpush1.msra.mxu0 0.0
  %1050 = vmatprep.subr.mxu0 0.0
  %1051 = vmatpush1.msra.mxu0 0.0
  %1052 = vmatprep.subr.mxu0 0.0
  %1053 = vmatpush1.msra.mxu0 0.0
  %1054 = vmatprep.subr.mxu0 0.0
  %1055 = vmatpush1.msra.mxu0 0.0
  %1056 = vmatprep.subr.mxu0 0.0
  %1057 = vmatpush1.msra.mxu0 0.0
  %1058 = vmatprep.subr.mxu0 0.0
  %1059 = vmatpush1.msra.mxu0 0.0
  %1060 = vmatprep.subr.mxu0 0.0
  %1061 = vmatpush1.msra.mxu0 0.0
  %1062 = vmatprep.subr.mxu0 0.0
  %1063 = vmatpush1.msra.mxu0 0.0
  %1064 = vmatprep.subr.mxu0 0.0
  %1065 = vmatpush1.msra.mxu0 0.0
  %1066 = vmatprep.subr.mxu0 0.0
  %1067 = vmatpush1.msra.mxu0 0.0
  %1068 = vmatprep.subr.mxu0 0.0
  %1069 = vmatpush1.msra.mxu0 0.0
  %1070 = vmatprep.subr.mxu0 0.0
  %1071 = vmatpush1.msra.mxu0 0.0
  %1072 = vmatprep.mubr.f32.mxu0 0.0
  %1073 = vmatmul.mubr.f32.gmra.mrb[0].mxu0 %v1003
  %v1074 = vpop.f32.mrb[0].mxu0
  %v1075 = vadd.f32 %v1001, %v1074
  %v1076 = vpop.f32.mrb[0].mxu0
  %1077 = vmatprep.mubr.f32.mxu0 0.0
  %1078 = vmatmul.mubr.f32.gmra.mrb[0].mxu0 %v1006
  %v1079 = vpop.f32.mrb[0].mxu0
  %v1080 = vadd.f32 %v1001, %v1079
  %v1081 = vpop.f32.mrb[0].mxu0
  %1082 = vdwg.mxu0
  %v1083 = vmul.f32 %v1075, 0.5
  %v1084 = vmul.f32 %v1080, 0.5
  %v1085 = vmul.f32 %v1075, 0.044715
  %v1086 = vmul.f32 %v1080, 0.044715
  %v1087 = vmul.f32 %v1085, %v1075
  %v1088 = vmul.f32 %v1086, %v1080
  %v1089 = vmul.f32 %v1087, %v1075
  %v1090 = vmul.f32 %v1088, %v1080
  %v1091 = vadd.f32 %v1075, %v1089
  %v1092 = vadd.f32 %v1080, %v1090
  %v1093 = vmul.f32 %v1091, 0.7978846
  %v1094 = vmul.f32 %v1092, 0.7978846
  %v1095 = vtanh.pop %v1093
  %v1096 = vtanh.pop %v1094
  %v1097 = vadd.f32 %v1095, 1.0
  %v1098 = vadd.f32 %v1096, 1.0
  %v1099 = vmul.f32 %v1083, %v1097
  %v1100 = vmul.f32 %v1084, %v1098
  %v1101 = vld [vmem:[%s11] sm:$0xff]
  %v1102 = vld [vmem:[%s11 + $0x8] sm:$0xff]
  %v1103 = vld [vmem:[%s11 + $0x10] sm:$0xff]
  %v1104 = vld [vmem:[%s11 + $0x18] sm:$0xff]
  %v1105 = vld [vmem:[%s11 + $0x20] sm:$0xff]
  %v1106 = vld [vmem:[%s11 + $0x28] sm:$0xff]
  %v1107 = vld [vmem:[%s11 + $0x30] sm:$0xff]
  %v1108 = vld [vmem:[%s11 + $0x38] sm:$0xff]
  %v1109 = vld [vmem:[%s11 + $0x40] sm:$0xff]
  %v1110 = vld [vmem:[%s11 + $0x48] sm:$0xff]
  %v1111 = vld [vmem:[%s11 + $0x50] sm:$0xff]
  %v1112 = vld [vmem:[%s11 + $0x58] sm:$0xff]
  %v1113 = vld [vmem:[%s11 + $0x60] sm:$0xff]
  %v1114 = vld [vmem:[%s11 + $0x68] sm:$0xff]
  %v1115 = vld [vmem:[%s11 + $0x70] sm:$0xff]
  %v1116 = vld [vmem:[%s11 + $0x78] sm:$0xff]
  %1117 = vmatprep.subr.mxu0 0.0
  %1118 = vmatpush1.msra.mxu0 %v1101
  %1119 = vmatprep.subr.mxu0 0.0
  %1120 = vmatpush1.msra.mxu0 %v1102
  %1121 = vmatprep.subr.mxu0 0.0
  %1122 = vmatpush1.msra.mxu0 %v1103
  %1123 = vmatprep.subr.mxu0 0.0
  %1124 = vmatpush1.msra.mxu0 %v1104
  %1125 = vmatprep.subr.mxu0 0.0
  %1126 = vmatpush1.msra.mxu0 %v1105
  %1127 = vmatprep.subr.mxu0 0.0
  %1128 = vmatpush1.msra.mxu0 %v1106
  %1129 = vmatprep.subr.mxu0 0.0
  %1130 = vmatpush1.msra.mxu0 %v1107
  %1131 = vmatprep.subr.mxu0 0.0
  %1132 = vmatpush1.msra.mxu0 %v1108
  %1133 = vmatprep.subr.mxu0 0.0
  %1134 = vmatpush1.msra.mxu0 %v1109
  %1135 = vmatprep.subr.mxu0 0.0
  %1136 = vmatpush1.msra.mxu0 %v1110
  %1137 = vmatprep.subr.mxu0 0.0
  %1138 = vmatpush1.msra.mxu0 %v1111
  %1139 = vmatprep.subr.mxu0 0.0
  %1140 = vmatpush1.msra.mxu0 %v1112
  %1141 = vmatprep.subr.mxu0 0.0
  %1142 = vmatpush1.msra.mxu0 %v1113
  %1143 = vmatprep.subr.mxu0 0.0
  %1144 = vmatpush1.msra.mxu0 %v1114
  %1145 = vmatprep.subr.mxu0 0.0
  %1146 = vmatpush1.msra.mxu0 %v1115
  %1147 = vmatprep.subr.mxu0 0.0
  %1148 = vmatpush1.msra.mxu0 %v1116
  %1149 = vmatprep.subr.mxu0 0.0
  %1150 = vmatpush1.msra.mxu0 0.0
  %1151 = vmatprep.subr.mxu0 0.0
  %1152 = vmatpush1.msra.mxu0 0.0
  %1153 = vmatprep.subr.mxu0 0.0
  %1154 = vmatpush1.msra.mxu0 0.0
  %1155 = vmatprep.subr.mxu0 0.0
  %1156 = vmatpush1.msra.mxu0 0.0
  %1157 = vmatprep.subr.mxu0 0.0
  %1158 = vmatpush1.msra.mxu0 0.0
  %1159 = vmatprep.subr.mxu0 0.0
  %1160 = vmatpush1.msra.mxu0 0.0
  %1161 = vmatprep.subr.mxu0 0.0
  %1162 = vmatpush1.msra.mxu0 0.0
  %1163 = vmatprep.subr.mxu0 0.0
  %1164 = vmatpush1.msra.mxu0 0.0
  %1165 = vmatprep.subr.mxu0 0.0
  %1166 = vmatpush1.msra.mxu0 0.0
  %1167 = vmatprep.subr.mxu0 0.0
  %1168 = vmatpush1.msra.mxu0 0.0
  %1169 = vmatprep.subr.mxu0 0.0
  %1170 = vmatpush1.msra.mxu0 0.0
  %1171 = vmatprep.subr.mxu0 0.0
  %1172 = vmatpush1.msra.mxu0 0.0
  %1173 = vmatprep.subr.mxu0 0.0
  %1174 = vmatpush1.msra.mxu0 0.0
  %1175 = vmatprep.subr.mxu0 0.0
  %1176 = vmatpush1.msra.mxu0 0.0
  %1177 = vmatprep.subr.mxu0 0.0
  %1178 = vmatpush1.msra.mxu0 0.0
  %1179 = vmatprep.subr.mxu0 0.0
  %1180 = vmatpush1.msra.mxu0 0.0
  %1181 = vmatprep.mubr.f32.mxu0 0.0
  %1182 = vmatmul.mubr.f32.gmra.mrb[0].mxu0 %v1099
  %v1183 = vpop.f32.mrb[0].mxu0
  %v1184 = vadd.f32 0.0, %v1183
  %v1185 = vpop.f32.mrb[0].mxu0
  %1186 = vmatprep.mubr.f32.mxu0 0.0
  %1187 = vmatmul.mubr.f32.gmra.mrb[0].mxu0 %v1100
  %v1188 = vpop.f32.mrb[0].mxu0
  %v1189 = vadd.f32 0.0, %v1188
  %v1190 = vpop.f32.mrb[0].mxu0
  %1191 = vdwg.mxu0
  %v1192 = vadd.f32 %v953, %v1184
  %v1193 = vadd.f32 %v954, %v1189
  %v1194 = vlaneseq
  %v1195 = vshrl.u32 %v1194, 7
  %v1196 = vsub.s32 5, %v1195
  %v1197 = vrot.slane %v243, %v1196
  %v1198 = vadd.f32 %v1192, %v1197
  %v1199 = vadd.f32 %v1193, %v1197
  %s1200 = scalar_lea.vmem %s5, 8
  %v1201 = vld [vmem:[%s1200] sm:$0x3f]
  %v1202 = vsel %vm244, %v1198, 0.0
  %1203 = vadd.xlane.f32.xlu0 %v1202
  %v1204 = vpop.xlane.xlu0 %1203
  %v1205 = vsel %vm244, %v1199, 0.0
  %1206 = vadd.xlane.f32.xlu0 %v1205
  %v1207 = vpop.xlane.xlu0 %1206
  %v1208 = vmul.f32 %v1204, %v251
  %v1209 = vmul.f32 %v1207, %v251
  %v1210 = vsub.f32 %v1198, %v1208
  %v1211 = vsub.f32 %v1199, %v1209
  %v1212 = vmul.f32 %v1210, %v1210
  %v1213 = vmul.f32 %v1211, %v1211
  %v1214 = vsel %vm244, %v1212, 0.0
  %1215 = vadd.xlane.f32.xlu0 %v1214
  %v1216 = vpop.xlane.xlu0 %1215
  %v1217 = vsel %vm244, %v1213, 0.0
  %1218 = vadd.xlane.f32.xlu0 %v1217
  %v1219 = vpop.xlane.xlu0 %1218
  %v1220 = vmul.f32 %v1216, %v251
  %v1221 = vmul.f32 %v1219, %v251
  %v1222 = vadd.f32 %v1220, 1e-05
  %v1223 = vadd.f32 %v1221, 1e-05
  %v1224 = vrsqrt.pop %v1222
  %v1225 = vrsqrt.pop %v1223
  %v1226 = vmul.f32 %v1210, %v1224
  %v1227 = vmul.f32 %v1211, %v1225
  %v1228 = vlaneseq
  %v1229 = vshrl.u32 %v1228, 7
  %v1230 = vsub.s32 0, %v1229
  %v1231 = vrot.slane %v1201, %v1230
  %v1232 = vmul.f32 %v1226, %v1231
  %v1233 = vmul.f32 %v1227, %v1231
  %v1234 = vlaneseq
  %v1235 = vshrl.u32 %v1234, 7
  %v1236 = vsub.s32 1, %v1235
  %v1237 = vrot.slane %v1201, %v1236
  %v1238 = vadd.f32 %v1232, %v1237
  %v1239 = vadd.f32 %v1233, %v1237
  %s1240 = scalar_lea.vmem %s6, 32
  %v1241 = vld [vmem:[%s1240] sm:$0xff]
  %v1242 = vld [vmem:[%s1240 + $0x8] sm:$0xff]
  %v1243 = vld [vmem:[%s1240 + $0x10] sm:$0xff]
  %v1244 = vld [vmem:[%s1240 + $0x18] sm:$0xff]
  %v1245 = vld [vmem:[%s7 + $0x1] sm:$0x1]
  %v1246 = vlaneseq
  %v1247 = vshrl.u32 %v1246, 7
  %v1248 = vsub.s32 0, %v1247
  %v1249 = vrot.slane %v1245, %v1248
  %v1251 = vsel %vm244, %v1238, 0
  %v1254 = vsel %vm244, %v1239, 0
  %1256 = vmatprep.subr.mxu0 0.0
  %1257 = vmatpush1.msra.mxu0 %v1241
  %1258 = vmatprep.subr.mxu0 0.0
  %1259 = vmatpush1.msra.mxu0 %v1242
  %1260 = vmatprep.subr.mxu0 0.0
  %1261 = vmatpush1.msra.mxu0 %v1243
  %1262 = vmatprep.subr.mxu0 0.0
  %1263 = vmatpush1.msra.mxu0 %v1244
  %1264 = vmatprep.subr.mxu0 0.0
  %1265 = vmatpush1.msra.mxu0 0.0
  %1266 = vmatprep.subr.mxu0 0.0
  %1267 = vmatpush1.msra.mxu0 0.0
  %1268 = vmatprep.subr.mxu0 0.0
  %1269 = vmatpush1.msra.mxu0 0.0
  %1270 = vmatprep.subr.mxu0 0.0
  %1271 = vmatpush1.msra.mxu0 0.0
  %1272 = vmatprep.subr.mxu0 0.0
  %1273 = vmatpush1.msra.mxu0 0.0
  %1274 = vmatprep.subr.mxu0 0.0
  %1275 = vmatpush1.msra.mxu0 0.0
  %1276 = vmatprep.subr.mxu0 0.0
  %1277 = vmatpush1.msra.mxu0 0.0
  %1278 = vmatprep.subr.mxu0 0.0
  %1279 = vmatpush1.msra.mxu0 0.0
  %1280 = vmatprep.subr.mxu0 0.0
  %1281 = vmatpush1.msra.mxu0 0.0
  %1282 = vmatprep.subr.mxu0 0.0
  %1283 = vmatpush1.msra.mxu0 0.0
  %1284 = vmatprep.subr.mxu0 0.0
  %1285 = vmatpush1.msra.mxu0 0.0
  %1286 = vmatprep.subr.mxu0 0.0
  %1287 = vmatpush1.msra.mxu0 0.0
  %1288 = vmatprep.subr.mxu0 0.0
  %1289 = vmatpush1.msra.mxu0 0.0
  %1290 = vmatprep.subr.mxu0 0.0
  %1291 = vmatpush1.msra.mxu0 0.0
  %1292 = vmatprep.subr.mxu0 0.0
  %1293 = vmatpush1.msra.mxu0 0.0
  %1294 = vmatprep.subr.mxu0 0.0
  %1295 = vmatpush1.msra.mxu0 0.0
  %1296 = vmatprep.subr.mxu0 0.0
  %1297 = vmatpush1.msra.mxu0 0.0
  %1298 = vmatprep.subr.mxu0 0.0
  %1299 = vmatpush1.msra.mxu0 0.0
  %1300 = vmatprep.subr.mxu0 0.0
  %1301 = vmatpush1.msra.mxu0 0.0
  %1302 = vmatprep.subr.mxu0 0.0
  %1303 = vmatpush1.msra.mxu0 0.0
  %1304 = vmatprep.subr.mxu0 0.0
  %1305 = vmatpush1.msra.mxu0 0.0
  %1306 = vmatprep.subr.mxu0 0.0
  %1307 = vmatpush1.msra.mxu0 0.0
  %1308 = vmatprep.subr.mxu0 0.0
  %1309 = vmatpush1.msra.mxu0 0.0
  %1310 = vmatprep.subr.mxu0 0.0
  %1311 = vmatpush1.msra.mxu0 0.0
  %1312 = vmatprep.subr.mxu0 0.0
  %1313 = vmatpush1.msra.mxu0 0.0
  %1314 = vmatprep.subr.mxu0 0.0
  %1315 = vmatpush1.msra.mxu0 0.0
  %1316 = vmatprep.subr.mxu0 0.0
  %1317 = vmatpush1.msra.mxu0 0.0
  %1318 = vmatprep.subr.mxu0 0.0
  %1319 = vmatpush1.msra.mxu0 0.0
  %1320 = vmatprep.mubr.f32.mxu0 0.0
  %1321 = vmatmul.mubr.f32.gmra.mrb[0].mxu0 %v1251
  %v1322 = vpop.f32.mrb[0].mxu0
  %v1323 = vadd.f32 %v1249, %v1322
  %v1324 = vpop.f32.mrb[0].mxu0
  %1325 = vmatprep.mubr.f32.mxu0 0.0
  %1326 = vmatmul.mubr.f32.gmra.mrb[0].mxu0 %v1254
  %v1327 = vpop.f32.mrb[0].mxu0
  %v1328 = vadd.f32 %v1249, %v1327
  %v1329 = vpop.f32.mrb[0].mxu0
  %1330 = vdwg.mxu0
  %s1331 = scalar_lea.vmem %s8, 32
  %v1332 = vld [vmem:[%s1331] sm:$0xff]
  %v1333 = vld [vmem:[%s1331 + $0x8] sm:$0xff]
  %v1334 = vld [vmem:[%s1331 + $0x10] sm:$0xff]
  %v1335 = vld [vmem:[%s1331 + $0x18] sm:$0xff]
  %1338 = vrot.lane.b32.xlu0 %v1323, 96
  %v1339 = vpop.permute.xlu0 %1338
  %1340 = vrot.lane.b32.xlu0 %v1328, 96
  %v1341 = vpop.permute.xlu0 %1340
  %v1342 = vsel %vm384, %v1323, 0
  %v1344 = vsel %vm384, %v1328, 0
  %v1346 = vsel %vm384, %v1339, 0
  %v1348 = vsel %vm384, %v1341, 0
  %1350 = vmatprep.subr.mxu0 0.0
  %1351 = vmatpush1.xpose.msra.mxu0 %v1346
  %1352 = vmatprep.subr.mxu0 0.0
  %1353 = vmatpush1.xpose.msra.mxu0 %v1348
  %1354 = vmatprep.subr.mxu0 0.0
  %1355 = vmatpush1.xpose.msra.mxu0 0.0
  %1356 = vmatprep.subr.mxu0 0.0
  %1357 = vmatpush1.xpose.msra.mxu0 0.0
  %1358 = vmatprep.subr.mxu0 0.0
  %1359 = vmatpush1.xpose.msra.mxu0 0.0
  %1360 = vmatprep.subr.mxu0 0.0
  %1361 = vmatpush1.xpose.msra.mxu0 0.0
  %1362 = vmatprep.subr.mxu0 0.0
  %1363 = vmatpush1.xpose.msra.mxu0 0.0
  %1364 = vmatprep.subr.mxu0 0.0
  %1365 = vmatpush1.xpose.msra.mxu0 0.0
  %1366 = vmatprep.subr.mxu0 0.0
  %1367 = vmatpush1.xpose.msra.mxu0 0.0
  %1368 = vmatprep.subr.mxu0 0.0
  %1369 = vmatpush1.xpose.msra.mxu0 0.0
  %1370 = vmatprep.subr.mxu0 0.0
  %1371 = vmatpush1.xpose.msra.mxu0 0.0
  %1372 = vmatprep.subr.mxu0 0.0
  %1373 = vmatpush1.xpose.msra.mxu0 0.0
  %1374 = vmatprep.subr.mxu0 0.0
  %1375 = vmatpush1.xpose.msra.mxu0 0.0
  %1376 = vmatprep.subr.mxu0 0.0
  %1377 = vmatpush1.xpose.msra.mxu0 0.0
  %1378 = vmatprep.subr.mxu0 0.0
  %1379 = vmatpush1.xpose.msra.mxu0 0.0
  %1380 = vmatprep.subr.mxu0 0.0
  %1381 = vmatpush1.xpose.msra.mxu0 0.0
  %1382 = vmatprep.subr.mxu0 0.0
  %1383 = vmatpush1.xpose.msra.mxu0 0.0
  %1384 = vmatprep.subr.mxu0 0.0
  %1385 = vmatpush1.xpose.msra.mxu0 0.0
  %1386 = vmatprep.subr.mxu0 0.0
  %1387 = vmatpush1.xpose.msra.mxu0 0.0
  %1388 = vmatprep.subr.mxu0 0.0
  %1389 = vmatpush1.xpose.msra.mxu0 0.0
  %1390 = vmatprep.subr.mxu0 0.0
  %1391 = vmatpush1.xpose.msra.mxu0 0.0
  %1392 = vmatprep.subr.mxu0 0.0
  %1393 = vmatpush1.xpose.msra.mxu0 0.0
  %1394 = vmatprep.subr.mxu0 0.0
  %1395 = vmatpush1.xpose.msra.mxu0 0.0
  %1396 = vmatprep.subr.mxu0 0.0
  %1397 = vmatpush1.xpose.msra.mxu0 0.0
  %1398 = vmatprep.subr.mxu0 0.0
  %1399 = vmatpush1.xpose.msra.mxu0 0.0
  %1400 = vmatprep.subr.mxu0 0.0
  %1401 = vmatpush1.xpose.msra.mxu0 0.0
  %1402 = vmatprep.subr.mxu0 0.0
  %1403 = vmatpush1.xpose.msra.mxu0 0.0
  %1404 = vmatprep.subr.mxu0 0.0
  %1405 = vmatpush1.xpose.msra.mxu0 0.0
  %1406 = vmatprep.subr.mxu0 0.0
  %1407 = vmatpush1.xpose.msra.mxu0 0.0
  %1408 = vmatprep.subr.mxu0 0.0
  %1409 = vmatpush1.xpose.msra.mxu0 0.0
  %1410 = vmatprep.subr.mxu0 0.0
  %1411 = vmatpush1.xpose.msra.mxu0 0.0
  %1412 = vmatprep.subr.mxu0 0.0
  %1413 = vmatpush1.xpose.msra.mxu0 0.0
  %1414 = vmatprep.mubr.f32.mxu0 0.0
  %1415 = vmatmul.mubr.f32.gmra.mrb[0].mxu0 %v1342
  %v1416 = vpop.f32.mrb[0].mxu0
  %v1417 = vadd.f32 0.0, %v1416
  %v1418 = vpop.f32.mrb[0].mxu0
  %1419 = vmatprep.mubr.f32.mxu0 0.0
  %1420 = vmatmul.mubr.f32.gmra.mrb[0].mxu0 %v1344
  %v1421 = vpop.f32.mrb[0].mxu0
  %v1422 = vadd.f32 0.0, %v1421
  %v1423 = vpop.f32.mrb[0].mxu0
  %1424 = vdwg.mxu0
  %v1425 = vmul.f32 %v1417, 0.25
  %v1426 = vmul.f32 %v1422, 0.25
  %v1427 = vadd.f32 %v1425, %v241
  %v1428 = vadd.f32 %v1426, %v242
  %v1429 = vsel %vm384, %v1427, -inf
  %1430 = vmax.xlane.f32.xlu0 %v1429
  %v1431 = vpop.xlane.xlu0 %1430
  %v1432 = vsel %vm384, %v1428, -inf
  %1433 = vmax.xlane.f32.xlu0 %v1432
  %v1434 = vpop.xlane.xlu0 %1433
  %v1435 = vsub.f32 %v1427, %v1431
  %v1436 = vsub.f32 %v1428, %v1434
  %v1437 = vmul.f32 %v1435, 1.442695
  %v1438 = vpow.pop %v1437
  %v1439 = vmul.f32 %v1436, 1.442695
  %v1440 = vpow.pop %v1439
  %v1441 = vsel %vm384, %v1438, 0.0
  %1442 = vadd.xlane.f32.xlu0 %v1441
  %v1443 = vpop.xlane.xlu0 %1442
  %v1444 = vsel %vm384, %v1440, 0.0
  %1445 = vadd.xlane.f32.xlu0 %v1444
  %v1446 = vpop.xlane.xlu0 %1445
  %v1447 = vrcp.pop %v1443
  %v1448 = vrcp.pop %v1446
  %v1449 = vmul.f32 %v1438, %v1447
  %v1450 = vmul.f32 %v1440, %v1448
  %1451 = vrot.lane.b32.xlu0 %v1323, 64
  %v1452 = vpop.permute.xlu0 %1451
  %1453 = vrot.lane.b32.xlu0 %v1328, 64
  %v1454 = vpop.permute.xlu0 %1453
  %v1458 = vsel %vm384, %v1449, 0
  %v1461 = vsel %vm384, %v1450, 0
  %1463 = vmatprep.subr.mxu0 0.0
  %1464 = vmatpush1.msra.mxu0 %v1452
  %1465 = vmatprep.subr.mxu0 0.0
  %1466 = vmatpush1.msra.mxu0 %v1454
  %1467 = vmatprep.subr.mxu0 0.0
  %1468 = vmatpush1.msra.mxu0 0.0
  %1469 = vmatprep.subr.mxu0 0.0
  %1470 = vmatpush1.msra.mxu0 0.0
  %1471 = vmatprep.subr.mxu0 0.0
  %1472 = vmatpush1.msra.mxu0 0.0
  %1473 = vmatprep.subr.mxu0 0.0
  %1474 = vmatpush1.msra.mxu0 0.0
  %1475 = vmatprep.subr.mxu0 0.0
  %1476 = vmatpush1.msra.mxu0 0.0
  %1477 = vmatprep.subr.mxu0 0.0
  %1478 = vmatpush1.msra.mxu0 0.0
  %1479 = vmatprep.subr.mxu0 0.0
  %1480 = vmatpush1.msra.mxu0 0.0
  %1481 = vmatprep.subr.mxu0 0.0
  %1482 = vmatpush1.msra.mxu0 0.0
  %1483 = vmatprep.subr.mxu0 0.0
  %1484 = vmatpush1.msra.mxu0 0.0
  %1485 = vmatprep.subr.mxu0 0.0
  %1486 = vmatpush1.msra.mxu0 0.0
  %1487 = vmatprep.subr.mxu0 0.0
  %1488 = vmatpush1.msra.mxu0 0.0
  %1489 = vmatprep.subr.mxu0 0.0
  %1490 = vmatpush1.msra.mxu0 0.0
  %1491 = vmatprep.subr.mxu0 0.0
  %1492 = vmatpush1.msra.mxu0 0.0
  %1493 = vmatprep.subr.mxu0 0.0
  %1494 = vmatpush1.msra.mxu0 0.0
  %1495 = vmatprep.subr.mxu0 0.0
  %1496 = vmatpush1.msra.mxu0 0.0
  %1497 = vmatprep.subr.mxu0 0.0
  %1498 = vmatpush1.msra.mxu0 0.0
  %1499 = vmatprep.subr.mxu0 0.0
  %1500 = vmatpush1.msra.mxu0 0.0
  %1501 = vmatprep.subr.mxu0 0.0
  %1502 = vmatpush1.msra.mxu0 0.0
  %1503 = vmatprep.subr.mxu0 0.0
  %1504 = vmatpush1.msra.mxu0 0.0
  %1505 = vmatprep.subr.mxu0 0.0
  %1506 = vmatpush1.msra.mxu0 0.0
  %1507 = vmatprep.subr.mxu0 0.0
  %1508 = vmatpush1.msra.mxu0 0.0
  %1509 = vmatprep.subr.mxu0 0.0
  %1510 = vmatpush1.msra.mxu0 0.0
  %1511 = vmatprep.subr.mxu0 0.0
  %1512 = vmatpush1.msra.mxu0 0.0
  %1513 = vmatprep.subr.mxu0 0.0
  %1514 = vmatpush1.msra.mxu0 0.0
  %1515 = vmatprep.subr.mxu0 0.0
  %1516 = vmatpush1.msra.mxu0 0.0
  %1517 = vmatprep.subr.mxu0 0.0
  %1518 = vmatpush1.msra.mxu0 0.0
  %1519 = vmatprep.subr.mxu0 0.0
  %1520 = vmatpush1.msra.mxu0 0.0
  %1521 = vmatprep.subr.mxu0 0.0
  %1522 = vmatpush1.msra.mxu0 0.0
  %1523 = vmatprep.subr.mxu0 0.0
  %1524 = vmatpush1.msra.mxu0 0.0
  %1525 = vmatprep.subr.mxu0 0.0
  %1526 = vmatpush1.msra.mxu0 0.0
  %1527 = vmatprep.mubr.f32.mxu0 0.0
  %1528 = vmatmul.mubr.f32.gmra.mrb[0].mxu0 %v1458
  %v1529 = vpop.f32.mrb[0].mxu0
  %v1530 = vadd.f32 0.0, %v1529
  %v1531 = vpop.f32.mrb[0].mxu0
  %1532 = vmatprep.mubr.f32.mxu0 0.0
  %1533 = vmatmul.mubr.f32.gmra.mrb[0].mxu0 %v1461
  %v1534 = vpop.f32.mrb[0].mxu0
  %v1535 = vadd.f32 0.0, %v1534
  %v1536 = vpop.f32.mrb[0].mxu0
  %1537 = vdwg.mxu0
  %1538 = vrot.lane.b32.xlu0 %v1323, 112
  %v1539 = vpop.permute.xlu0 %1538
  %1540 = vrot.lane.b32.xlu0 %v1328, 112
  %v1541 = vpop.permute.xlu0 %1540
  %1542 = vrot.lane.b32.xlu0 %v1323, 80
  %v1543 = vpop.permute.xlu0 %1542
  %1544 = vrot.lane.b32.xlu0 %v1328, 80
  %v1545 = vpop.permute.xlu0 %1544
  %v1546 = vsel %vm384, %v1539, 0
  %v1548 = vsel %vm384, %v1541, 0
  %v1550 = vsel %vm384, %v1543, 0
  %v1552 = vsel %vm384, %v1545, 0
  %1554 = vmatprep.subr.mxu0 0.0
  %1555 = vmatpush1.xpose.msra.mxu0 %v1550
  %1556 = vmatprep.subr.mxu0 0.0
  %1557 = vmatpush1.xpose.msra.mxu0 %v1552
  %1558 = vmatprep.subr.mxu0 0.0
  %1559 = vmatpush1.xpose.msra.mxu0 0.0
  %1560 = vmatprep.subr.mxu0 0.0
  %1561 = vmatpush1.xpose.msra.mxu0 0.0
  %1562 = vmatprep.subr.mxu0 0.0
  %1563 = vmatpush1.xpose.msra.mxu0 0.0
  %1564 = vmatprep.subr.mxu0 0.0
  %1565 = vmatpush1.xpose.msra.mxu0 0.0
  %1566 = vmatprep.subr.mxu0 0.0
  %1567 = vmatpush1.xpose.msra.mxu0 0.0
  %1568 = vmatprep.subr.mxu0 0.0
  %1569 = vmatpush1.xpose.msra.mxu0 0.0
  %1570 = vmatprep.subr.mxu0 0.0
  %1571 = vmatpush1.xpose.msra.mxu0 0.0
  %1572 = vmatprep.subr.mxu0 0.0
  %1573 = vmatpush1.xpose.msra.mxu0 0.0
  %1574 = vmatprep.subr.mxu0 0.0
  %1575 = vmatpush1.xpose.msra.mxu0 0.0
  %1576 = vmatprep.subr.mxu0 0.0
  %1577 = vmatpush1.xpose.msra.mxu0 0.0
  %1578 = vmatprep.subr.mxu0 0.0
  %1579 = vmatpush1.xpose.msra.mxu0 0.0
  %1580 = vmatprep.subr.mxu0 0.0
  %1581 = vmatpush1.xpose.msra.mxu0 0.0
  %1582 = vmatprep.subr.mxu0 0.0
  %1583 = vmatpush1.xpose.msra.mxu0 0.0
  %1584 = vmatprep.subr.mxu0 0.0
  %1585 = vmatpush1.xpose.msra.mxu0 0.0
  %1586 = vmatprep.subr.mxu0 0.0
  %1587 = vmatpush1.xpose.msra.mxu0 0.0
  %1588 = vmatprep.subr.mxu0 0.0
  %1589 = vmatpush1.xpose.msra.mxu0 0.0
  %1590 = vmatprep.subr.mxu0 0.0
  %1591 = vmatpush1.xpose.msra.mxu0 0.0
  %1592 = vmatprep.subr.mxu0 0.0
  %1593 = vmatpush1.xpose.msra.mxu0 0.0
  %1594 = vmatprep.subr.mxu0 0.0
  %1595 = vmatpush1.xpose.msra.mxu0 0.0
  %1596 = vmatprep.subr.mxu0 0.0
  %1597 = vmatpush1.xpose.msra.mxu0 0.0
  %1598 = vmatprep.subr.mxu0 0.0
  %1599 = vmatpush1.xpose.msra.mxu0 0.0
  %1600 = vmatprep.subr.mxu0 0.0
  %1601 = vmatpush1.xpose.msra.mxu0 0.0
  %1602 = vmatprep.subr.mxu0 0.0
  %1603 = vmatpush1.xpose.msra.mxu0 0.0
  %1604 = vmatprep.subr.mxu0 0.0
  %1605 = vmatpush1.xpose.msra.mxu0 0.0
  %1606 = vmatprep.subr.mxu0 0.0
  %1607 = vmatpush1.xpose.msra.mxu0 0.0
  %1608 = vmatprep.subr.mxu0 0.0
  %1609 = vmatpush1.xpose.msra.mxu0 0.0
  %1610 = vmatprep.subr.mxu0 0.0
  %1611 = vmatpush1.xpose.msra.mxu0 0.0
  %1612 = vmatprep.subr.mxu0 0.0
  %1613 = vmatpush1.xpose.msra.mxu0 0.0
  %1614 = vmatprep.subr.mxu0 0.0
  %1615 = vmatpush1.xpose.msra.mxu0 0.0
  %1616 = vmatprep.subr.mxu0 0.0
  %1617 = vmatpush1.xpose.msra.mxu0 0.0
  %1618 = vmatprep.mubr.f32.mxu0 0.0
  %1619 = vmatmul.mubr.f32.gmra.mrb[0].mxu0 %v1546
  %v1620 = vpop.f32.mrb[0].mxu0
  %v1621 = vadd.f32 0.0, %v1620
  %v1622 = vpop.f32.mrb[0].mxu0
  %1623 = vmatprep.mubr.f32.mxu0 0.0
  %1624 = vmatmul.mubr.f32.gmra.mrb[0].mxu0 %v1548
  %v1625 = vpop.f32.mrb[0].mxu0
  %v1626 = vadd.f32 0.0, %v1625
  %v1627 = vpop.f32.mrb[0].mxu0
  %1628 = vdwg.mxu0
  %v1629 = vmul.f32 %v1621, 0.25
  %v1630 = vmul.f32 %v1626, 0.25
  %v1631 = vadd.f32 %v1629, %v241
  %v1632 = vadd.f32 %v1630, %v242
  %v1633 = vsel %vm384, %v1631, -inf
  %1634 = vmax.xlane.f32.xlu0 %v1633
  %v1635 = vpop.xlane.xlu0 %1634
  %v1636 = vsel %vm384, %v1632, -inf
  %1637 = vmax.xlane.f32.xlu0 %v1636
  %v1638 = vpop.xlane.xlu0 %1637
  %v1639 = vsub.f32 %v1631, %v1635
  %v1640 = vsub.f32 %v1632, %v1638
  %v1641 = vmul.f32 %v1639, 1.442695
  %v1642 = vpow.pop %v1641
  %v1643 = vmul.f32 %v1640, 1.442695
  %v1644 = vpow.pop %v1643
  %v1645 = vsel %vm384, %v1642, 0.0
  %1646 = vadd.xlane.f32.xlu0 %v1645
  %v1647 = vpop.xlane.xlu0 %1646
  %v1648 = vsel %vm384, %v1644, 0.0
  %1649 = vadd.xlane.f32.xlu0 %v1648
  %v1650 = vpop.xlane.xlu0 %1649
  %v1651 = vrcp.pop %v1647
  %v1652 = vrcp.pop %v1650
  %v1653 = vmul.f32 %v1642, %v1651
  %v1654 = vmul.f32 %v1644, %v1652
  %1655 = vrot.lane.b32.xlu0 %v1323, 48
  %v1656 = vpop.permute.xlu0 %1655
  %1657 = vrot.lane.b32.xlu0 %v1328, 48
  %v1658 = vpop.permute.xlu0 %1657
  %v1662 = vsel %vm384, %v1653, 0
  %v1665 = vsel %vm384, %v1654, 0
  %1667 = vmatprep.subr.mxu0 0.0
  %1668 = vmatpush1.msra.mxu0 %v1656
  %1669 = vmatprep.subr.mxu0 0.0
  %1670 = vmatpush1.msra.mxu0 %v1658
  %1671 = vmatprep.subr.mxu0 0.0
  %1672 = vmatpush1.msra.mxu0 0.0
  %1673 = vmatprep.subr.mxu0 0.0
  %1674 = vmatpush1.msra.mxu0 0.0
  %1675 = vmatprep.subr.mxu0 0.0
  %1676 = vmatpush1.msra.mxu0 0.0
  %1677 = vmatprep.subr.mxu0 0.0
  %1678 = vmatpush1.msra.mxu0 0.0
  %1679 = vmatprep.subr.mxu0 0.0
  %1680 = vmatpush1.msra.mxu0 0.0
  %1681 = vmatprep.subr.mxu0 0.0
  %1682 = vmatpush1.msra.mxu0 0.0
  %1683 = vmatprep.subr.mxu0 0.0
  %1684 = vmatpush1.msra.mxu0 0.0
  %1685 = vmatprep.subr.mxu0 0.0
  %1686 = vmatpush1.msra.mxu0 0.0
  %1687 = vmatprep.subr.mxu0 0.0
  %1688 = vmatpush1.msra.mxu0 0.0
  %1689 = vmatprep.subr.mxu0 0.0
  %1690 = vmatpush1.msra.mxu0 0.0
  %1691 = vmatprep.subr.mxu0 0.0
  %1692 = vmatpush1.msra.mxu0 0.0
  %1693 = vmatprep.subr.mxu0 0.0
  %1694 = vmatpush1.msra.mxu0 0.0
  %1695 = vmatprep.subr.mxu0 0.0
  %1696 = vmatpush1.msra.mxu0 0.0
  %1697 = vmatprep.subr.mxu0 0.0
  %1698 = vmatpush1.msra.mxu0 0.0
  %1699 = vmatprep.subr.mxu0 0.0
  %1700 = vmatpush1.msra.mxu0 0.0
  %1701 = vmatprep.subr.mxu0 0.0
  %1702 = vmatpush1.msra.mxu0 0.0
  %1703 = vmatprep.subr.mxu0 0.0
  %1704 = vmatpush1.msra.mxu0 0.0
  %1705 = vmatprep.subr.mxu0 0.0
  %1706 = vmatpush1.msra.mxu0 0.0
  %1707 = vmatprep.subr.mxu0 0.0
  %1708 = vmatpush1.msra.mxu0 0.0
  %1709 = vmatprep.subr.mxu0 0.0
  %1710 = vmatpush1.msra.mxu0 0.0
  %1711 = vmatprep.subr.mxu0 0.0
  %1712 = vmatpush1.msra.mxu0 0.0
  %1713 = vmatprep.subr.mxu0 0.0
  %1714 = vmatpush1.msra.mxu0 0.0
  %1715 = vmatprep.subr.mxu0 0.0
  %1716 = vmatpush1.msra.mxu0 0.0
  %1717 = vmatprep.subr.mxu0 0.0
  %1718 = vmatpush1.msra.mxu0 0.0
  %1719 = vmatprep.subr.mxu0 0.0
  %1720 = vmatpush1.msra.mxu0 0.0
  %1721 = vmatprep.subr.mxu0 0.0
  %1722 = vmatpush1.msra.mxu0 0.0
  %1723 = vmatprep.subr.mxu0 0.0
  %1724 = vmatpush1.msra.mxu0 0.0
  %1725 = vmatprep.subr.mxu0 0.0
  %1726 = vmatpush1.msra.mxu0 0.0
  %1727 = vmatprep.subr.mxu0 0.0
  %1728 = vmatpush1.msra.mxu0 0.0
  %1729 = vmatprep.subr.mxu0 0.0
  %1730 = vmatpush1.msra.mxu0 0.0
  %1731 = vmatprep.mubr.f32.mxu0 0.0
  %1732 = vmatmul.mubr.f32.gmra.mrb[0].mxu0 %v1662
  %v1733 = vpop.f32.mrb[0].mxu0
  %v1734 = vadd.f32 0.0, %v1733
  %v1735 = vpop.f32.mrb[0].mxu0
  %1736 = vmatprep.mubr.f32.mxu0 0.0
  %1737 = vmatmul.mubr.f32.gmra.mrb[0].mxu0 %v1665
  %v1738 = vpop.f32.mrb[0].mxu0
  %v1739 = vadd.f32 0.0, %v1738
  %v1740 = vpop.f32.mrb[0].mxu0
  %1741 = vdwg.mxu0
  %v1743 = vsel %vm384, %v1734, 0
  %v1746 = vsel %vm384, %v1739, 0
  %1748 = vmatprep.subr.mxu0 0.0
  %1749 = vmatpush1.msra.mxu0 %v1334
  %1750 = vmatprep.subr.mxu0 0.0
  %1751 = vmatpush1.msra.mxu0 %v1335
  %1752 = vmatprep.subr.mxu0 0.0
  %1753 = vmatpush1.msra.mxu0 0.0
  %1754 = vmatprep.subr.mxu0 0.0
  %1755 = vmatpush1.msra.mxu0 0.0
  %1756 = vmatprep.subr.mxu0 0.0
  %1757 = vmatpush1.msra.mxu0 0.0
  %1758 = vmatprep.subr.mxu0 0.0
  %1759 = vmatpush1.msra.mxu0 0.0
  %1760 = vmatprep.subr.mxu0 0.0
  %1761 = vmatpush1.msra.mxu0 0.0
  %1762 = vmatprep.subr.mxu0 0.0
  %1763 = vmatpush1.msra.mxu0 0.0
  %1764 = vmatprep.subr.mxu0 0.0
  %1765 = vmatpush1.msra.mxu0 0.0
  %1766 = vmatprep.subr.mxu0 0.0
  %1767 = vmatpush1.msra.mxu0 0.0
  %1768 = vmatprep.subr.mxu0 0.0
  %1769 = vmatpush1.msra.mxu0 0.0
  %1770 = vmatprep.subr.mxu0 0.0
  %1771 = vmatpush1.msra.mxu0 0.0
  %1772 = vmatprep.subr.mxu0 0.0
  %1773 = vmatpush1.msra.mxu0 0.0
  %1774 = vmatprep.subr.mxu0 0.0
  %1775 = vmatpush1.msra.mxu0 0.0
  %1776 = vmatprep.subr.mxu0 0.0
  %1777 = vmatpush1.msra.mxu0 0.0
  %1778 = vmatprep.subr.mxu0 0.0
  %1779 = vmatpush1.msra.mxu0 0.0
  %1780 = vmatprep.subr.mxu0 0.0
  %1781 = vmatpush1.msra.mxu0 0.0
  %1782 = vmatprep.subr.mxu0 0.0
  %1783 = vmatpush1.msra.mxu0 0.0
  %1784 = vmatprep.subr.mxu0 0.0
  %1785 = vmatpush1.msra.mxu0 0.0
  %1786 = vmatprep.subr.mxu0 0.0
  %1787 = vmatpush1.msra.mxu0 0.0
  %1788 = vmatprep.subr.mxu0 0.0
  %1789 = vmatpush1.msra.mxu0 0.0
  %1790 = vmatprep.subr.mxu0 0.0
  %1791 = vmatpush1.msra.mxu0 0.0
  %1792 = vmatprep.subr.mxu0 0.0
  %1793 = vmatpush1.msra.mxu0 0.0
  %1794 = vmatprep.subr.mxu0 0.0
  %1795 = vmatpush1.msra.mxu0 0.0
  %1796 = vmatprep.subr.mxu0 0.0
  %1797 = vmatpush1.msra.mxu0 0.0
  %1798 = vmatprep.subr.mxu0 0.0
  %1799 = vmatpush1.msra.mxu0 0.0
  %1800 = vmatprep.subr.mxu0 0.0
  %1801 = vmatpush1.msra.mxu0 0.0
  %1802 = vmatprep.subr.mxu0 0.0
  %1803 = vmatpush1.msra.mxu0 0.0
  %1804 = vmatprep.subr.mxu0 0.0
  %1805 = vmatpush1.msra.mxu0 0.0
  %1806 = vmatprep.subr.mxu0 0.0
  %1807 = vmatpush1.msra.mxu0 0.0
  %1808 = vmatprep.subr.mxu0 0.0
  %1809 = vmatpush1.msra.mxu0 0.0
  %1810 = vmatprep.subr.mxu0 0.0
  %1811 = vmatpush1.msra.mxu0 0.0
  %1812 = vmatprep.mubr.f32.mxu0 0.0
  %1813 = vmatmul.mubr.f32.gmra.mrb[0].mxu0 %v1743
  %v1814 = vpop.f32.mrb[0].mxu0
  %v1815 = vadd.f32 0.0, %v1814
  %v1816 = vpop.f32.mrb[0].mxu0
  %1817 = vmatprep.mubr.f32.mxu0 0.0
  %1818 = vmatmul.mubr.f32.gmra.mrb[0].mxu0 %v1746
  %v1819 = vpop.f32.mrb[0].mxu0
  %v1820 = vadd.f32 0.0, %v1819
  %v1821 = vpop.f32.mrb[0].mxu0
  %1822 = vdwg.mxu0
  %v1824 = vsel %vm384, %v1530, 0
  %v1827 = vsel %vm384, %v1535, 0
  %1829 = vmatprep.subr.mxu0 0.0
  %1830 = vmatpush1.msra.mxu0 %v1332
  %1831 = vmatprep.subr.mxu0 0.0
  %1832 = vmatpush1.msra.mxu0 %v1333
  %1833 = vmatprep.subr.mxu0 0.0
  %1834 = vmatpush1.msra.mxu0 0.0
  %1835 = vmatprep.subr.mxu0 0.0
  %1836 = vmatpush1.msra.mxu0 0.0
  %1837 = vmatprep.subr.mxu0 0.0
  %1838 = vmatpush1.msra.mxu0 0.0
  %1839 = vmatprep.subr.mxu0 0.0
  %1840 = vmatpush1.msra.mxu0 0.0
  %1841 = vmatprep.subr.mxu0 0.0
  %1842 = vmatpush1.msra.mxu0 0.0
  %1843 = vmatprep.subr.mxu0 0.0
  %1844 = vmatpush1.msra.mxu0 0.0
  %1845 = vmatprep.subr.mxu0 0.0
  %1846 = vmatpush1.msra.mxu0 0.0
  %1847 = vmatprep.subr.mxu0 0.0
  %1848 = vmatpush1.msra.mxu0 0.0
  %1849 = vmatprep.subr.mxu0 0.0
  %1850 = vmatpush1.msra.mxu0 0.0
  %1851 = vmatprep.subr.mxu0 0.0
  %1852 = vmatpush1.msra.mxu0 0.0
  %1853 = vmatprep.subr.mxu0 0.0
  %1854 = vmatpush1.msra.mxu0 0.0
  %1855 = vmatprep.subr.mxu0 0.0
  %1856 = vmatpush1.msra.mxu0 0.0
  %1857 = vmatprep.subr.mxu0 0.0
  %1858 = vmatpush1.msra.mxu0 0.0
  %1859 = vmatprep.subr.mxu0 0.0
  %1860 = vmatpush1.msra.mxu0 0.0
  %1861 = vmatprep.subr.mxu0 0.0
  %1862 = vmatpush1.msra.mxu0 0.0
  %1863 = vmatprep.subr.mxu0 0.0
  %1864 = vmatpush1.msra.mxu0 0.0
  %1865 = vmatprep.subr.mxu0 0.0
  %1866 = vmatpush1.msra.mxu0 0.0
  %1867 = vmatprep.subr.mxu0 0.0
  %1868 = vmatpush1.msra.mxu0 0.0
  %1869 = vmatprep.subr.mxu0 0.0
  %1870 = vmatpush1.msra.mxu0 0.0
  %1871 = vmatprep.subr.mxu0 0.0
  %1872 = vmatpush1.msra.mxu0 0.0
  %1873 = vmatprep.subr.mxu0 0.0
  %1874 = vmatpush1.msra.mxu0 0.0
  %1875 = vmatprep.subr.mxu0 0.0
  %1876 = vmatpush1.msra.mxu0 0.0
  %1877 = vmatprep.subr.mxu0 0.0
  %1878 = vmatpush1.msra.mxu0 0.0
  %1879 = vmatprep.subr.mxu0 0.0
  %1880 = vmatpush1.msra.mxu0 0.0
  %1881 = vmatprep.subr.mxu0 0.0
  %1882 = vmatpush1.msra.mxu0 0.0
  %1883 = vmatprep.subr.mxu0 0.0
  %1884 = vmatpush1.msra.mxu0 0.0
  %1885 = vmatprep.subr.mxu0 0.0
  %1886 = vmatpush1.msra.mxu0 0.0
  %1887 = vmatprep.subr.mxu0 0.0
  %1888 = vmatpush1.msra.mxu0 0.0
  %1889 = vmatprep.subr.mxu0 0.0
  %1890 = vmatpush1.msra.mxu0 0.0
  %1891 = vmatprep.subr.mxu0 0.0
  %1892 = vmatpush1.msra.mxu0 0.0
  %1893 = vmatprep.mubr.f32.mxu0 0.0
  %1894 = vmatmul.mubr.f32.gmra.mrb[0].mxu0 %v1824
  %v1895 = vpop.f32.mrb[0].mxu0
  %v1896 = vadd.f32 %v1815, %v1895
  %v1897 = vpop.f32.mrb[0].mxu0
  %1898 = vmatprep.mubr.f32.mxu0 0.0
  %1899 = vmatmul.mubr.f32.gmra.mrb[0].mxu0 %v1827
  %v1900 = vpop.f32.mrb[0].mxu0
  %v1901 = vadd.f32 %v1820, %v1900
  %v1902 = vpop.f32.mrb[0].mxu0
  %1903 = vdwg.mxu0
  %v1904 = vadd.f32 %v1198, %v1896
  %v1905 = vadd.f32 %v1199, %v1901
  %v1906 = vlaneseq
  %v1907 = vshrl.u32 %v1906, 7
  %v1908 = vsub.s32 4, %v1907
  %v1909 = vrot.slane %v1201, %v1908
  %v1910 = vadd.f32 %v1904, %v1909
  %v1911 = vadd.f32 %v1905, %v1909
  %v1912 = vsel %vm244, %v1910, 0.0
  %1913 = vadd.xlane.f32.xlu0 %v1912
  %v1914 = vpop.xlane.xlu0 %1913
  %v1915 = vsel %vm244, %v1911, 0.0
  %1916 = vadd.xlane.f32.xlu0 %v1915
  %v1917 = vpop.xlane.xlu0 %1916
  %v1918 = vmul.f32 %v1914, %v251
  %v1919 = vmul.f32 %v1917, %v251
  %v1920 = vsub.f32 %v1910, %v1918
  %v1921 = vsub.f32 %v1911, %v1919
  %v1922 = vmul.f32 %v1920, %v1920
  %v1923 = vmul.f32 %v1921, %v1921
  %v1924 = vsel %vm244, %v1922, 0.0
  %1925 = vadd.xlane.f32.xlu0 %v1924
  %v1926 = vpop.xlane.xlu0 %1925
  %v1927 = vsel %vm244, %v1923, 0.0
  %1928 = vadd.xlane.f32.xlu0 %v1927
  %v1929 = vpop.xlane.xlu0 %1928
  %v1930 = vmul.f32 %v1926, %v251
  %v1931 = vmul.f32 %v1929, %v251
  %v1932 = vadd.f32 %v1930, 1e-05
  %v1933 = vadd.f32 %v1931, 1e-05
  %v1934 = vrsqrt.pop %v1932
  %v1935 = vrsqrt.pop %v1933
  %v1936 = vmul.f32 %v1920, %v1934
  %v1937 = vmul.f32 %v1921, %v1935
  %v1938 = vlaneseq
  %v1939 = vshrl.u32 %v1938, 7
  %v1940 = vsub.s32 2, %v1939
  %v1941 = vrot.slane %v1201, %v1940
  %v1942 = vmul.f32 %v1936, %v1941
  %v1943 = vmul.f32 %v1937, %v1941
  %v1944 = vlaneseq
  %v1945 = vshrl.u32 %v1944, 7
  %v1946 = vsub.s32 3, %v1945
  %v1947 = vrot.slane %v1201, %v1946
  %v1948 = vadd.f32 %v1942, %v1947
  %v1949 = vadd.f32 %v1943, %v1947
  %s1950 = scalar_lea.vmem %s9, 32
  %v1951 = vld [vmem:[%s1950] sm:$0xff]
  %v1952 = vld [vmem:[%s1950 + $0x8] sm:$0xff]
  %v1953 = vld [vmem:[%s1950 + $0x10] sm:$0xff]
  %v1954 = vld [vmem:[%s1950 + $0x18] sm:$0xff]
  %v1955 = vld [vmem:[%s10 + $0x1] sm:$0x1]
  %v1956 = vlaneseq
  %v1957 = vshrl.u32 %v1956, 7
  %v1958 = vsub.s32 0, %v1957
  %v1959 = vrot.slane %v1955, %v1958
  %v1961 = vsel %vm244, %v1948, 0
  %v1964 = vsel %vm244, %v1949, 0
  %1966 = vmatprep.subr.mxu0 0.0
  %1967 = vmatpush1.msra.mxu0 %v1951
  %1968 = vmatprep.subr.mxu0 0.0
  %1969 = vmatpush1.msra.mxu0 %v1952
  %1970 = vmatprep.subr.mxu0 0.0
  %1971 = vmatpush1.msra.mxu0 %v1953
  %1972 = vmatprep.subr.mxu0 0.0
  %1973 = vmatpush1.msra.mxu0 %v1954
  %1974 = vmatprep.subr.mxu0 0.0
  %1975 = vmatpush1.msra.mxu0 0.0
  %1976 = vmatprep.subr.mxu0 0.0
  %1977 = vmatpush1.msra.mxu0 0.0
  %1978 = vmatprep.subr.mxu0 0.0
  %1979 = vmatpush1.msra.mxu0 0.0
  %1980 = vmatprep.subr.mxu0 0.0
  %1981 = vmatpush1.msra.mxu0 0.0
  %1982 = vmatprep.subr.mxu0 0.0
  %1983 = vmatpush1.msra.mxu0 0.0
  %1984 = vmatprep.subr.mxu0 0.0
  %1985 = vmatpush1.msra.mxu0 0.0
  %1986 = vmatprep.subr.mxu0 0.0
  %1987 = vmatpush1.msra.mxu0 0.0
  %1988 = vmatprep.subr.mxu0 0.0
  %1989 = vmatpush1.msra.mxu0 0.0
  %1990 = vmatprep.subr.mxu0 0.0
  %1991 = vmatpush1.msra.mxu0 0.0
  %1992 = vmatprep.subr.mxu0 0.0
  %1993 = vmatpush1.msra.mxu0 0.0
  %1994 = vmatprep.subr.mxu0 0.0
  %1995 = vmatpush1.msra.mxu0 0.0
  %1996 = vmatprep.subr.mxu0 0.0
  %1997 = vmatpush1.msra.mxu0 0.0
  %1998 = vmatprep.subr.mxu0 0.0
  %1999 = vmatpush1.msra.mxu0 0.0
  %2000 = vmatprep.subr.mxu0 0.0
  %2001 = vmatpush1.msra.mxu0 0.0
  %2002 = vmatprep.subr.mxu0 0.0
  %2003 = vmatpush1.msra.mxu0 0.0
  %2004 = vmatprep.subr.mxu0 0.0
  %2005 = vmatpush1.msra.mxu0 0.0
  %2006 = vmatprep.subr.mxu0 0.0
  %2007 = vmatpush1.msra.mxu0 0.0
  %2008 = vmatprep.subr.mxu0 0.0
  %2009 = vmatpush1.msra.mxu0 0.0
  %2010 = vmatprep.subr.mxu0 0.0
  %2011 = vmatpush1.msra.mxu0 0.0
  %2012 = vmatprep.subr.mxu0 0.0
  %2013 = vmatpush1.msra.mxu0 0.0
  %2014 = vmatprep.subr.mxu0 0.0
  %2015 = vmatpush1.msra.mxu0 0.0
  %2016 = vmatprep.subr.mxu0 0.0
  %2017 = vmatpush1.msra.mxu0 0.0
  %2018 = vmatprep.subr.mxu0 0.0
  %2019 = vmatpush1.msra.mxu0 0.0
  %2020 = vmatprep.subr.mxu0 0.0
  %2021 = vmatpush1.msra.mxu0 0.0
  %2022 = vmatprep.subr.mxu0 0.0
  %2023 = vmatpush1.msra.mxu0 0.0
  %2024 = vmatprep.subr.mxu0 0.0
  %2025 = vmatpush1.msra.mxu0 0.0
  %2026 = vmatprep.subr.mxu0 0.0
  %2027 = vmatpush1.msra.mxu0 0.0
  %2028 = vmatprep.subr.mxu0 0.0
  %2029 = vmatpush1.msra.mxu0 0.0
  %2030 = vmatprep.mubr.f32.mxu0 0.0
  %2031 = vmatmul.mubr.f32.gmra.mrb[0].mxu0 %v1961
  %v2032 = vpop.f32.mrb[0].mxu0
  %v2033 = vadd.f32 %v1959, %v2032
  %v2034 = vpop.f32.mrb[0].mxu0
  %2035 = vmatprep.mubr.f32.mxu0 0.0
  %2036 = vmatmul.mubr.f32.gmra.mrb[0].mxu0 %v1964
  %v2037 = vpop.f32.mrb[0].mxu0
  %v2038 = vadd.f32 %v1959, %v2037
  %v2039 = vpop.f32.mrb[0].mxu0
  %2040 = vdwg.mxu0
  %v2041 = vmul.f32 %v2033, 0.5
  %v2042 = vmul.f32 %v2038, 0.5
  %v2043 = vmul.f32 %v2033, 0.044715
  %v2044 = vmul.f32 %v2038, 0.044715
  %v2045 = vmul.f32 %v2043, %v2033
  %v2046 = vmul.f32 %v2044, %v2038
  %v2047 = vmul.f32 %v2045, %v2033
  %v2048 = vmul.f32 %v2046, %v2038
  %v2049 = vadd.f32 %v2033, %v2047
  %v2050 = vadd.f32 %v2038, %v2048
  %v2051 = vmul.f32 %v2049, 0.7978846
  %v2052 = vmul.f32 %v2050, 0.7978846
  %v2053 = vtanh.pop %v2051
  %v2054 = vtanh.pop %v2052
  %v2055 = vadd.f32 %v2053, 1.0
  %v2056 = vadd.f32 %v2054, 1.0
  %v2057 = vmul.f32 %v2041, %v2055
  %v2058 = vmul.f32 %v2042, %v2056
  %s2059 = scalar_lea.vmem %s11, 128
  %v2060 = vld [vmem:[%s2059] sm:$0xff]
  %v2061 = vld [vmem:[%s2059 + $0x8] sm:$0xff]
  %v2062 = vld [vmem:[%s2059 + $0x10] sm:$0xff]
  %v2063 = vld [vmem:[%s2059 + $0x18] sm:$0xff]
  %v2064 = vld [vmem:[%s2059 + $0x20] sm:$0xff]
  %v2065 = vld [vmem:[%s2059 + $0x28] sm:$0xff]
  %v2066 = vld [vmem:[%s2059 + $0x30] sm:$0xff]
  %v2067 = vld [vmem:[%s2059 + $0x38] sm:$0xff]
  %v2068 = vld [vmem:[%s2059 + $0x40] sm:$0xff]
  %v2069 = vld [vmem:[%s2059 + $0x48] sm:$0xff]
  %v2070 = vld [vmem:[%s2059 + $0x50] sm:$0xff]
  %v2071 = vld [vmem:[%s2059 + $0x58] sm:$0xff]
  %v2072 = vld [vmem:[%s2059 + $0x60] sm:$0xff]
  %v2073 = vld [vmem:[%s2059 + $0x68] sm:$0xff]
  %v2074 = vld [vmem:[%s2059 + $0x70] sm:$0xff]
  %v2075 = vld [vmem:[%s2059 + $0x78] sm:$0xff]
  %2076 = vmatprep.subr.mxu0 0.0
  %2077 = vmatpush1.msra.mxu0 %v2060
  %2078 = vmatprep.subr.mxu0 0.0
  %2079 = vmatpush1.msra.mxu0 %v2061
  %2080 = vmatprep.subr.mxu0 0.0
  %2081 = vmatpush1.msra.mxu0 %v2062
  %2082 = vmatprep.subr.mxu0 0.0
  %2083 = vmatpush1.msra.mxu0 %v2063
  %2084 = vmatprep.subr.mxu0 0.0
  %2085 = vmatpush1.msra.mxu0 %v2064
  %2086 = vmatprep.subr.mxu0 0.0
  %2087 = vmatpush1.msra.mxu0 %v2065
  %2088 = vmatprep.subr.mxu0 0.0
  %2089 = vmatpush1.msra.mxu0 %v2066
  %2090 = vmatprep.subr.mxu0 0.0
  %2091 = vmatpush1.msra.mxu0 %v2067
  %2092 = vmatprep.subr.mxu0 0.0
  %2093 = vmatpush1.msra.mxu0 %v2068
  %2094 = vmatprep.subr.mxu0 0.0
  %2095 = vmatpush1.msra.mxu0 %v2069
  %2096 = vmatprep.subr.mxu0 0.0
  %2097 = vmatpush1.msra.mxu0 %v2070
  %2098 = vmatprep.subr.mxu0 0.0
  %2099 = vmatpush1.msra.mxu0 %v2071
  %2100 = vmatprep.subr.mxu0 0.0
  %2101 = vmatpush1.msra.mxu0 %v2072
  %2102 = vmatprep.subr.mxu0 0.0
  %2103 = vmatpush1.msra.mxu0 %v2073
  %2104 = vmatprep.subr.mxu0 0.0
  %2105 = vmatpush1.msra.mxu0 %v2074
  %2106 = vmatprep.subr.mxu0 0.0
  %2107 = vmatpush1.msra.mxu0 %v2075
  %2108 = vmatprep.subr.mxu0 0.0
  %2109 = vmatpush1.msra.mxu0 0.0
  %2110 = vmatprep.subr.mxu0 0.0
  %2111 = vmatpush1.msra.mxu0 0.0
  %2112 = vmatprep.subr.mxu0 0.0
  %2113 = vmatpush1.msra.mxu0 0.0
  %2114 = vmatprep.subr.mxu0 0.0
  %2115 = vmatpush1.msra.mxu0 0.0
  %2116 = vmatprep.subr.mxu0 0.0
  %2117 = vmatpush1.msra.mxu0 0.0
  %2118 = vmatprep.subr.mxu0 0.0
  %2119 = vmatpush1.msra.mxu0 0.0
  %2120 = vmatprep.subr.mxu0 0.0
  %2121 = vmatpush1.msra.mxu0 0.0
  %2122 = vmatprep.subr.mxu0 0.0
  %2123 = vmatpush1.msra.mxu0 0.0
  %2124 = vmatprep.subr.mxu0 0.0
  %2125 = vmatpush1.msra.mxu0 0.0
  %2126 = vmatprep.subr.mxu0 0.0
  %2127 = vmatpush1.msra.mxu0 0.0
  %2128 = vmatprep.subr.mxu0 0.0
  %2129 = vmatpush1.msra.mxu0 0.0
  %2130 = vmatprep.subr.mxu0 0.0
  %2131 = vmatpush1.msra.mxu0 0.0
  %2132 = vmatprep.subr.mxu0 0.0
  %2133 = vmatpush1.msra.mxu0 0.0
  %2134 = vmatprep.subr.mxu0 0.0
  %2135 = vmatpush1.msra.mxu0 0.0
  %2136 = vmatprep.subr.mxu0 0.0
  %2137 = vmatpush1.msra.mxu0 0.0
  %2138 = vmatprep.subr.mxu0 0.0
  %2139 = vmatpush1.msra.mxu0 0.0
  %2140 = vmatprep.mubr.f32.mxu0 0.0
  %2141 = vmatmul.mubr.f32.gmra.mrb[0].mxu0 %v2057
  %v2142 = vpop.f32.mrb[0].mxu0
  %v2143 = vadd.f32 0.0, %v2142
  %v2144 = vpop.f32.mrb[0].mxu0
  %2145 = vmatprep.mubr.f32.mxu0 0.0
  %2146 = vmatmul.mubr.f32.gmra.mrb[0].mxu0 %v2058
  %v2147 = vpop.f32.mrb[0].mxu0
  %v2148 = vadd.f32 0.0, %v2147
  %v2149 = vpop.f32.mrb[0].mxu0
  %2150 = vdwg.mxu0
  %v2151 = vadd.f32 %v1910, %v2143
  %v2152 = vadd.f32 %v1911, %v2148
  %v2153 = vlaneseq
  %v2154 = vshrl.u32 %v2153, 7
  %v2155 = vsub.s32 5, %v2154
  %v2156 = vrot.slane %v1201, %v2155
  %v2157 = vadd.f32 %v2151, %v2156
  %v2158 = vadd.f32 %v2152, %v2156
  %v2159 = vld [vmem:[%s12] sm:$0x1]
  %v2160 = vld [vmem:[%s12 + $0x1] sm:$0x1]
  %v2161 = vsel %vm244, %v2157, 0.0
  %2162 = vadd.xlane.f32.xlu0 %v2161
  %v2163 = vpop.xlane.xlu0 %2162
  %v2164 = vsel %vm244, %v2158, 0.0
  %2165 = vadd.xlane.f32.xlu0 %v2164
  %v2166 = vpop.xlane.xlu0 %2165
  %v2167 = vmul.f32 %v2163, %v251
  %v2168 = vmul.f32 %v2166, %v251
  %v2169 = vsub.f32 %v2157, %v2167
  %v2170 = vsub.f32 %v2158, %v2168
  %v2171 = vmul.f32 %v2169, %v2169
  %v2172 = vmul.f32 %v2170, %v2170
  %v2173 = vsel %vm244, %v2171, 0.0
  %2174 = vadd.xlane.f32.xlu0 %v2173
  %v2175 = vpop.xlane.xlu0 %2174
  %v2176 = vsel %vm244, %v2172, 0.0
  %2177 = vadd.xlane.f32.xlu0 %v2176
  %v2178 = vpop.xlane.xlu0 %2177
  %v2179 = vmul.f32 %v2175, %v251
  %v2180 = vmul.f32 %v2178, %v251
  %v2181 = vadd.f32 %v2179, 1e-05
  %v2182 = vadd.f32 %v2180, 1e-05
  %v2183 = vrsqrt.pop %v2181
  %v2184 = vrsqrt.pop %v2182
  %v2185 = vmul.f32 %v2169, %v2183
  %v2186 = vmul.f32 %v2170, %v2184
  %v2187 = vlaneseq
  %v2188 = vshrl.u32 %v2187, 7
  %v2189 = vsub.s32 0, %v2188
  %v2190 = vrot.slane %v2159, %v2189
  %v2191 = vmul.f32 %v2185, %v2190
  %v2192 = vmul.f32 %v2186, %v2190
  %v2193 = vlaneseq
  %v2194 = vshrl.u32 %v2193, 7
  %v2195 = vsub.s32 0, %v2194
  %v2196 = vrot.slane %v2160, %v2195
  %v2197 = vadd.f32 %v2191, %v2196
  %v2198 = vadd.f32 %v2192, %v2196
  %v2199 = vld [vmem:[%s13] sm:$0xff]
  %v2200 = vld [vmem:[%s13 + $0x8] sm:$0xff]
  %v2201 = vld [vmem:[%s13 + $0x10] sm:$0xff]
  %v2202 = vld [vmem:[%s13 + $0x18] sm:$0xff]
  %v2203 = vld [vmem:[%s14] sm:$0x1]
  %v2205 = vlaneseq
  %v2206 = vshrl.u32 %v2205, 7
  %v2207 = vsub.s32 0, %v2206
  %v2208 = vrot.slane %v2203, %v2207
  %v2211 = vsel %vm244, %v2197, 0
  %v2214 = vsel %vm244, %v2198, 0
  %2216 = vmatprep.subr.mxu0 0.0
  %2217 = vmatpush1.msra.mxu0 %v2199
  %2218 = vmatprep.subr.mxu0 0.0
  %2219 = vmatpush1.msra.mxu0 %v2200
  %2220 = vmatprep.subr.mxu0 0.0
  %2221 = vmatpush1.msra.mxu0 %v2201
  %2222 = vmatprep.subr.mxu0 0.0
  %2223 = vmatpush1.msra.mxu0 %v2202
  %2224 = vmatprep.subr.mxu0 0.0
  %2225 = vmatpush1.msra.mxu0 0.0
  %2226 = vmatprep.subr.mxu0 0.0
  %2227 = vmatpush1.msra.mxu0 0.0
  %2228 = vmatprep.subr.mxu0 0.0
  %2229 = vmatpush1.msra.mxu0 0.0
  %2230 = vmatprep.subr.mxu0 0.0
  %2231 = vmatpush1.msra.mxu0 0.0
  %2232 = vmatprep.subr.mxu0 0.0
  %2233 = vmatpush1.msra.mxu0 0.0
  %2234 = vmatprep.subr.mxu0 0.0
  %2235 = vmatpush1.msra.mxu0 0.0
  %2236 = vmatprep.subr.mxu0 0.0
  %2237 = vmatpush1.msra.mxu0 0.0
  %2238 = vmatprep.subr.mxu0 0.0
  %2239 = vmatpush1.msra.mxu0 0.0
  %2240 = vmatprep.subr.mxu0 0.0
  %2241 = vmatpush1.msra.mxu0 0.0
  %2242 = vmatprep.subr.mxu0 0.0
  %2243 = vmatpush1.msra.mxu0 0.0
  %2244 = vmatprep.subr.mxu0 0.0
  %2245 = vmatpush1.msra.mxu0 0.0
  %2246 = vmatprep.subr.mxu0 0.0
  %2247 = vmatpush1.msra.mxu0 0.0
  %2248 = vmatprep.subr.mxu0 0.0
  %2249 = vmatpush1.msra.mxu0 0.0
  %2250 = vmatprep.subr.mxu0 0.0
  %2251 = vmatpush1.msra.mxu0 0.0
  %2252 = vmatprep.subr.mxu0 0.0
  %2253 = vmatpush1.msra.mxu0 0.0
  %2254 = vmatprep.subr.mxu0 0.0
  %2255 = vmatpush1.msra.mxu0 0.0
  %2256 = vmatprep.subr.mxu0 0.0
  %2257 = vmatpush1.msra.mxu0 0.0
  %2258 = vmatprep.subr.mxu0 0.0
  %2259 = vmatpush1.msra.mxu0 0.0
  %2260 = vmatprep.subr.mxu0 0.0
  %2261 = vmatpush1.msra.mxu0 0.0
  %2262 = vmatprep.subr.mxu0 0.0
  %2263 = vmatpush1.msra.mxu0 0.0
  %2264 = vmatprep.subr.mxu0 0.0
  %2265 = vmatpush1.msra.mxu0 0.0
  %2266 = vmatprep.subr.mxu0 0.0
  %2267 = vmatpush1.msra.mxu0 0.0
  %2268 = vmatprep.subr.mxu0 0.0
  %2269 = vmatpush1.msra.mxu0 0.0
  %2270 = vmatprep.subr.mxu0 0.0
  %2271 = vmatpush1.msra.mxu0 0.0
  %2272 = vmatprep.subr.mxu0 0.0
  %2273 = vmatpush1.msra.mxu0 0.0
  %2274 = vmatprep.subr.mxu0 0.0
  %2275 = vmatpush1.msra.mxu0 0.0
  %2276 = vmatprep.subr.mxu0 0.0
  %2277 = vmatpush1.msra.mxu0 0.0
  %2278 = vmatprep.subr.mxu0 0.0
  %2279 = vmatpush1.msra.mxu0 0.0
  %2280 = vmatprep.mubr.f32.mxu0 0.0
  %2281 = vmatmul.mubr.f32.gmra.mrb[0].mxu0 %v2211
  %v2282 = vpop.f32.mrb[0].mxu0
  %v2283 = vadd.f32 %v2208, %v2282
  %v2284 = vpop.f32.mrb[0].mxu0
  %2285 = vmatprep.mubr.f32.mxu0 0.0
  %2286 = vmatmul.mubr.f32.gmra.mrb[0].mxu0 %v2214
  %v2287 = vpop.f32.mrb[0].mxu0
  %v2288 = vadd.f32 %v2208, %v2287
  %v2289 = vpop.f32.mrb[0].mxu0
  %2290 = vdwg.mxu0
  %2291 = vst [vmem:[%s15] sm:$0xff] %v2283
  %2292 = vst [vmem:[%s15 + $0x8] sm:$0xff] %v2288
  // Predicated region
  $region62: #{gpt2_classify.1} parent=0 // pred_check
    _
  $region63: #{gpt2_classify.1} parent=0 // pred_check_branch
    %2294 = sbr.rel (0) target = $region65
  $region64: #{gpt2_classify.1} parent=0 // pred_region
    _
  $region65: #{gpt2_classify.1} parent=0 // pred_fallthru
    _
  // Predicated region
  $region66: #{gpt2_classify.1} parent=0 // pred_check
    _
  $region67: #{gpt2_classify.1} parent=0 // pred_check_branch
    %2296 = sbr.rel (0) target = $region69
  $region68: #{gpt2_classify.1} parent=0 // pred_region
    _
  $region69: #{gpt2_classify.1} parent=0 // pred_fallthru
    _

</llo_original>
